<compile_context>
chip_gen: v7x
topology: tpu7x:2x2x1
jax: 0.10.0
libtpu: 0.0.40
codegen_flags: <defaults>
</compile_context>

<pallas_src>
import functools

import numpy as np
import jax
import jax.numpy as jnp
from jax.experimental import pallas as pl
from jax.experimental.pallas import tpu as pltpu

_EPS = 1e-5  # nn.InstanceNorm2d default eps


def _round_up(v, m):
    return ((v + m - 1) // m) * m


def _conv_out_hw(h, w, k, s, p):
    return (h + 2 * p - k) // s + 1, (w + 2 * p - k) // s + 1


def _instance_norm_relu(a):
    # a: (N, M, C) f32. InstanceNorm2d (affine=False): per-(batch, channel)
    # normalization over the spatial axis M, then ReLU.
    mean = jnp.mean(a, axis=1, keepdims=True)
    cen = a - mean
    var = jnp.mean(cen * cen, axis=1, keepdims=True)
    return jnp.maximum(cen * jax.lax.rsqrt(var + _EPS), 0.0)


# ---------------------------------------------------------------------------
# Fused DownBlock kernel: conv1 + IN + ReLU + conv2 + IN + ReLU, one call.
# ---------------------------------------------------------------------------
def _down_block_kernel(p_ref, w1_ref, t_ref, w2_ref, o_ref, *, n, m1, m2, kk):
    # p_ref : (n*m1, Kpad)      bf16  layer-1 im2col patches (batch fused into M)
    # w1_ref: (Kpad, Cpad)      bf16
    # t_ref : (kk*n*m2, n*m1)   bf16  0/1 conv2 tap-selection matrices (block-diag over batch)
    # w2_ref: (kk, Cpad, Cpad)  bf16  per-tap conv2 weights
    # o_ref : (n, m2, Cpad)     f32
    #
    # conv1 (bias omitted: it cancels in affine=False InstanceNorm) + IN + ReLU.
    acc1 = jnp.dot(p_ref[...], w1_ref[...], preferred_element_type=jnp.float32)
    h = _instance_norm_relu(acc1.reshape(n, m1, -1))          # (n, m1, Cpad) f32
    h2 = h.reshape(n * m1, -1).astype(jnp.bfloat16)           # (n*m1, Cpad)  bf16

    # conv2: "im2col" as a matmul with constant 0/1 selectors (exact: each row
    # of t_ref has at most one nonzero), then per-tap weight matmuls summed.
    sel = jnp.dot(t_ref[...], h2, preferred_element_type=jnp.float32)
    sel = sel.astype(jnp.bfloat16).reshape(kk, n * m2, -1)     # exact round trip
    acc2 = jnp.einsum("tmc,tcd->tmd", sel, w2_ref[...],
                      preferred_element_type=jnp.float32).sum(axis=0)

    # InstanceNorm + ReLU, lane-dense (Cpad = multiple of 128) store.
    o_ref[...] = _instance_norm_relu(acc2.reshape(n, m2, -1)).astype(o_ref.dtype)


# ---------------------------------------------------------------------------
# Host-side glue
# ---------------------------------------------------------------------------
def _im2col_bf16(x, k, s, p):
    # Layer-1 im2col: cast to bf16 first, pad, strided slices, concat (tap-major,
    # Cin fastest) -> (N*Ho*Wo, k*k*Cin).
    n, h, w, c = x.shape
    xp = jnp.pad(x.astype(jnp.bfloat16), ((0, 0), (p, p), (p, p), (0, 0)))
    ho, wo = _conv_out_hw(h, w, k, s, p)
    taps = []
    for kh in range(k):
        for kw in range(k):
            taps.append(jax.lax.slice(
                xp, (0, kh, kw, 0),
                (n, kh + s * (ho - 1) + 1, kw + s * (wo - 1) + 1, c),
                (1, s, s, 1)))
    pats = jnp.concatenate(taps, axis=-1)                      # (n, ho, wo, k*k*c)
    return pats.reshape(n * ho * wo, k * k * c)


def _conv2_tap_selectors(n, ho1, wo1, ho2, wo2, k, s, p):
    """T[t, b*M2+m2, b*M1+m1] = 1 iff conv2 tap t at output pos m2 (batch b)
    reads layer-1 output pos m1; zero-padding taps select nothing (stay 0)."""
    m1, m2 = ho1 * wo1, ho2 * wo2
    t_mat = np.zeros((k * k, n * m2, n * m1), np.float32)
    for kh in range(k):
        for kw in range(k):
            t = kh * k + kw
            for i2 in range(ho2):
                i1 = s * i2 + kh - p
                if not (0 <= i1 < ho1):
                    continue
                for j2 in range(wo2):
                    j1 = s * j2 + kw - p
                    if not (0 <= j1 < wo1):
                        continue
                    for b in range(n):
                        t_mat[t, b * m2 + i2 * wo2 + j2, b * m1 + i1 * wo1 + j1] = 1.0
    return t_mat.reshape(k * k * n * m2, n * m1)


def down_block_2d(x, params, *, kernel_size, stride, padding):
    """x: (N,H,W,Cin) f32. Fused DownBlock2D forward (single pallas_call)."""
    # TODO(synk): only the module defaults (norm='InstanceNorm2d' (affine=False),
    # activation='ReLU') are implemented; other norm/activation configs are not.
    w1, w2 = params["w1"], params["w2"]
    k, s, p = kernel_size, stride, padding
    assert w1.shape[0] == k and w2.shape[0] == k
    n, h, w, cin = x.shape
    cout = w1.shape[-1]

    ho1, wo1 = _conv_out_hw(h, w, k, s, p)
    ho2, wo2 = _conv_out_hw(ho1, wo1, k, s, p)
    m1, m2, kk = ho1 * wo1, ho2 * wo2, k * k
    kdim = kk * cin
    kpad = _round_up(kdim, 128)     # lane-aligned contraction dim
    cpad = _round_up(cout, 128)     # lane-dense channels (unmasked stores)

    # Layer-1 patches, batch fused into M; K zero-padded to 128 lanes.
    pats = _im2col_bf16(x, k, s, p)
    if kpad > kdim:
        pats = jnp.pad(pats, ((0, 0), (0, kpad - kdim)))

    # Conv weights (bias intentionally omitted: per-channel bias is exactly
    # absorbed by the affine=False InstanceNorm mean subtraction).
    w1_mat = jnp.pad(w1.reshape(kdim, cout),
                     ((0, kpad - kdim), (0, cpad - cout))).astype(jnp.bfloat16)
    w2_mat = jnp.pad(w2.reshape(kk, cout, cout),
                     ((0, 0), (0, cpad - cout), (0, cpad - cout))).astype(jnp.bfloat16)

    # Constant 0/1 selection matrices: conv2's im2col done as a matmul in-kernel.
    t_mat = jnp.asarray(_conv2_tap_selectors(n, ho1, wo1, ho2, wo2, k, s, p),
                        dtype=jnp.bfloat16)

    flops = (2 * (n * m1) * kpad * cpad
             + 2 * (kk * n * m2) * (n * m1) * cpad
             + 2 * kk * (n * m2) * cpad * cpad)
    bytes_accessed = (pats.size + w1_mat.size + t_mat.size + w2_mat.size) * 2 \
        + n * m2 * cpad * 4
    cost = pl.CostEstimate(flops=flops, transcendentals=2 * n * cpad,
                           bytes_accessed=bytes_accessed)

    # TODO(synk): on multi-TensorCore chips (v7x) a batch grid axis with
    # pltpu.CORE_PARALLEL would split batches across cores, and at large image
    # sizes an M-tiled grid with accumulator-based InstanceNorm would be needed
    # to stay within VMEM; at these shapes one fused step is optimal.
    out = pl.pallas_call(
        functools.partial(_down_block_kernel, n=n, m1=m1, m2=m2, kk=kk),
        out_shape=jax.ShapeDtypeStruct((n, m2, cpad), jnp.float32),
        grid=(1,),
        in_specs=[
            pl.BlockSpec((n * m1, kpad), lambda i: (0, 0)),        # patches
            pl.BlockSpec((kpad, cpad), lambda i: (0, 0)),          # conv1 weight
            pl.BlockSpec((kk * n * m2, n * m1), lambda i: (0, 0)),  # tap selectors
            pl.BlockSpec((kk, cpad, cpad), lambda i: (0, 0, 0)),   # conv2 weights
        ],
        out_specs=pl.BlockSpec((n, m2, cpad), lambda i: (0, 0, 0)),
        compiler_params=pltpu.CompilerParams(
            dimension_semantics=("arbitrary",)),
        cost_estimate=cost,
    )(pats, w1_mat, t_mat, w2_mat)

    return out[:, :, :cout].reshape(n, ho2, wo2, cout)


def init_params(key, c_in, c_out, k):
    k1, k2, k3, k4 = jax.random.split(key, 4)
    fan1 = c_in * k * k
    fan2 = c_out * k * k
    w1 = jax.random.normal(k1, (k, k, c_in, c_out), jnp.float32) / jnp.sqrt(fan1)
    b1 = jax.random.normal(k2, (c_out,), jnp.float32) * 0.1
    w2 = jax.random.normal(k3, (k, k, c_out, c_out), jnp.float32) / jnp.sqrt(fan2)
    b2 = jax.random.normal(k4, (c_out,), jnp.float32) * 0.1
    # b1/b2 kept for module fidelity; they are a mathematical no-op under
    # affine=False InstanceNorm and are not used by the fused kernel.
    return {"w1": w1, "b1": b1, "w2": w2, "b2": b2}


# Pure-JAX reference (lax conv + bias + InstanceNorm + ReLU) for correctness.
def _ref_layer(x, w, b, *, stride, padding):
    dn = jax.lax.conv_dimension_numbers(x.shape, w.shape, ("NHWC", "HWIO", "NHWC"))
    y = jax.lax.conv_general_dilated(
        x, w, window_strides=(stride, stride),
        padding=[(padding, padding)] * 2, dimension_numbers=dn) + b
    mean = y.mean(axis=(1, 2), keepdims=True)
    var = ((y - mean) ** 2).mean(axis=(1, 2), keepdims=True)
    return jnp.maximum((y - mean) * jax.lax.rsqrt(var + _EPS), 0.0)


if __name__ == "__main__":
    key = jax.random.PRNGKey(0)
    kx, kp = jax.random.split(key)

    C_in, C_out, ksz, stride, padding = 4, 8, 3, 2, 1
    # NHWC input (PyTorch NCHW equivalent: (2, 4, 16, 16)).
    x = jax.random.normal(kx, (2, 16, 16, C_in), jnp.float32)
    params = init_params(kp, C_in, C_out, ksz)

    fwd = jax.jit(functools.partial(down_block_2d, kernel_size=ksz,
                                    stride=stride, padding=padding))
    out = jax.block_until_ready(fwd(x, params))

    # Verify against the pure-JAX reference (which includes the conv biases —
    # they cancel under InstanceNorm).  bf16 matmul inputs, f32 accumulate.
    h_ref = _ref_layer(x, params["w1"], params["b1"], stride=stride, padding=padding)
    y_ref = _ref_layer(h_ref, params["w2"], params["b2"], stride=stride, padding=padding)
    assert out.shape == y_ref.shape, (out.shape, y_ref.shape)
    max_err = float(jnp.max(jnp.abs(out - y_ref)))
    assert jnp.allclose(out, y_ref, atol=5e-2, rtol=5e-2), max_err

    print("KERNEL_OK")
</pallas_src>

<mosaic_0001>
module attributes {stable_mosaic.version = 11 : i64} {
  func.func @_down_block_kernel(%arg0: i32, %arg1: memref<128x128xbf16, #tpu.memory_space<vmem>>, %arg2: memref<128x128xbf16, #tpu.memory_space<vmem>>, %arg3: memref<288x128xbf16, #tpu.memory_space<vmem>>, %arg4: memref<9x128x128xbf16, #tpu.memory_space<vmem>>, %arg5: memref<2x16x128xf32, #tpu.memory_space<vmem>>) attributes {dimension_semantics = [#tpu.dimension_semantics<arbitrary>], iteration_bounds = array<i64: 1>, scalar_prefetch = 0 : i64, scratch_operands = 0 : i64, tpu.core_type = #tpu.core_type<tc>, window_params = [{pipeline_mode = #tpu.pipeline_mode<synchronous>, transform_indices = @transform_0, window_bounds = array<i64: 128, 128>}, {pipeline_mode = #tpu.pipeline_mode<synchronous>, transform_indices = @transform_1, window_bounds = array<i64: 128, 128>}, {pipeline_mode = #tpu.pipeline_mode<synchronous>, transform_indices = @transform_2, window_bounds = array<i64: 288, 128>}, {pipeline_mode = #tpu.pipeline_mode<synchronous>, transform_indices = @transform_3, window_bounds = array<i64: 9, 128, 128>}, {pipeline_mode = #tpu.pipeline_mode<synchronous>, transform_indices = @transform_4, window_bounds = array<i64: 2, 16, 128>}]} {
    %c0 = arith.constant 0 : index
    %c0_0 = arith.constant 0 : index
    %0 = vector.load %arg1[%c0, %c0_0] : memref<128x128xbf16, #tpu.memory_space<vmem>>, vector<128x128xbf16>
    %c0_1 = arith.constant 0 : index
    %c0_2 = arith.constant 0 : index
    %1 = vector.load %arg2[%c0_1, %c0_2] : memref<128x128xbf16, #tpu.memory_space<vmem>>, vector<128x128xbf16>
    %cst = arith.constant dense<0.000000e+00> : vector<128x128xf32>
    %2 = tpu.matmul %0, %1, %cst {dimension_numbers = #tpu.dot_dimension_numbers<[1], [0], [0], [1], [0, 0, 1, 1], [], []>} : vector<128x128xbf16>, vector<128x128xbf16>, vector<128x128xf32> -> vector<128x128xf32>
    %3 = vector.shape_cast %2 : vector<128x128xf32> to vector<2x64x128xf32>
    %cst_3 = arith.constant dense<0.000000e+00> : vector<2x128xf32>
    %4 = vector.multi_reduction <add>, %3, %cst_3 [1] : vector<2x64x128xf32> to vector<2x128xf32>
    %5 = vector.shape_cast %4 : vector<2x128xf32> to vector<2x1x128xf32>
    %cst_4 = arith.constant 6.400000e+01 : f32
    %6 = vector.broadcast %cst_4 : f32 to vector<2x1x128xf32>
    %7 = arith.divf %5, %6 : vector<2x1x128xf32>
    %8 = vector.broadcast %7 : vector<2x1x128xf32> to vector<2x64x128xf32>
    %9 = arith.subf %3, %8 : vector<2x64x128xf32>
    %10 = arith.mulf %9, %9 : vector<2x64x128xf32>
    %cst_5 = arith.constant dense<0.000000e+00> : vector<2x128xf32>
    %11 = vector.multi_reduction <add>, %10, %cst_5 [1] : vector<2x64x128xf32> to vector<2x128xf32>
    %12 = vector.shape_cast %11 : vector<2x128xf32> to vector<2x1x128xf32>
    %cst_6 = arith.constant 6.400000e+01 : f32
    %13 = vector.broadcast %cst_6 : f32 to vector<2x1x128xf32>
    %14 = arith.divf %12, %13 : vector<2x1x128xf32>
    %cst_7 = arith.constant 9.99999974E-6 : f32
    %15 = vector.broadcast %cst_7 : f32 to vector<2x1x128xf32>
    %16 = arith.addf %14, %15 : vector<2x1x128xf32>
    %17 = math.rsqrt %16 : vector<2x1x128xf32>
    %18 = vector.broadcast %17 : vector<2x1x128xf32> to vector<2x64x128xf32>
    %19 = arith.mulf %9, %18 : vector<2x64x128xf32>
    %cst_8 = arith.constant 0.000000e+00 : f32
    %20 = vector.broadcast %cst_8 : f32 to vector<2x64x128xf32>
    %21 = arith.maximumf %19, %20 : vector<2x64x128xf32>
    %22 = vector.shape_cast %21 : vector<2x64x128xf32> to vector<128x128xf32>
    %23 = arith.truncf %22 : vector<128x128xf32> to vector<128x128xbf16>
    %c0_9 = arith.constant 0 : index
    %c0_10 = arith.constant 0 : index
    %24 = vector.load %arg3[%c0_9, %c0_10] : memref<288x128xbf16, #tpu.memory_space<vmem>>, vector<288x128xbf16>
    %cst_11 = arith.constant dense<0.000000e+00> : vector<288x128xf32>
    %25 = tpu.matmul %24, %23, %cst_11 {dimension_numbers = #tpu.dot_dimension_numbers<[1], [0], [0], [1], [0, 0, 1, 1], [], []>} : vector<288x128xbf16>, vector<128x128xbf16>, vector<288x128xf32> -> vector<288x128xf32>
    %26 = arith.truncf %25 : vector<288x128xf32> to vector<288x128xbf16>
    %27 = vector.shape_cast %26 : vector<288x128xbf16> to vector<9x32x128xbf16>
    %c0_12 = arith.constant 0 : index
    %c0_13 = arith.constant 0 : index
    %c0_14 = arith.constant 0 : index
    %28 = vector.load %arg4[%c0_12, %c0_13, %c0_14] : memref<9x128x128xbf16, #tpu.memory_space<vmem>>, vector<9x128x128xbf16>
    "tpu.trace_start"() <{level = 10 : i32, message = "tmc,tcd->tmd"}> : () -> ()
    %cst_15 = arith.constant dense<0.000000e+00> : vector<9x32x128xf32>
    %29 = tpu.matmul %27, %28, %cst_15 {dimension_numbers = #tpu.dot_dimension_numbers<[2], [1], [1], [2], [0, 0, 0, 1, 1, 2], [0], [0]>} : vector<9x32x128xbf16>, vector<9x128x128xbf16>, vector<9x32x128xf32> -> vector<9x32x128xf32>
    "tpu.trace_stop"() : () -> ()
    %cst_16 = arith.constant dense<0.000000e+00> : vector<32x128xf32>
    %30 = vector.multi_reduction <add>, %29, %cst_16 [0] : vector<9x32x128xf32> to vector<32x128xf32>
    %31 = vector.shape_cast %30 : vector<32x128xf32> to vector<2x16x128xf32>
    %cst_17 = arith.constant dense<0.000000e+00> : vector<2x128xf32>
    %32 = vector.multi_reduction <add>, %31, %cst_17 [1] : vector<2x16x128xf32> to vector<2x128xf32>
    %33 = vector.shape_cast %32 : vector<2x128xf32> to vector<2x1x128xf32>
    %cst_18 = arith.constant 1.600000e+01 : f32
    %34 = vector.broadcast %cst_18 : f32 to vector<2x1x128xf32>
    %35 = arith.divf %33, %34 : vector<2x1x128xf32>
    %36 = vector.broadcast %35 : vector<2x1x128xf32> to vector<2x16x128xf32>
    %37 = arith.subf %31, %36 : vector<2x16x128xf32>
    %38 = arith.mulf %37, %37 : vector<2x16x128xf32>
    %cst_19 = arith.constant dense<0.000000e+00> : vector<2x128xf32>
    %39 = vector.multi_reduction <add>, %38, %cst_19 [1] : vector<2x16x128xf32> to vector<2x128xf32>
    %40 = vector.shape_cast %39 : vector<2x128xf32> to vector<2x1x128xf32>
    %cst_20 = arith.constant 1.600000e+01 : f32
    %41 = vector.broadcast %cst_20 : f32 to vector<2x1x128xf32>
    %42 = arith.divf %40, %41 : vector<2x1x128xf32>
    %cst_21 = arith.constant 9.99999974E-6 : f32
    %43 = vector.broadcast %cst_21 : f32 to vector<2x1x128xf32>
    %44 = arith.addf %42, %43 : vector<2x1x128xf32>
    %45 = math.rsqrt %44 : vector<2x1x128xf32>
    %46 = vector.broadcast %45 : vector<2x1x128xf32> to vector<2x16x128xf32>
    %47 = arith.mulf %37, %46 : vector<2x16x128xf32>
    %cst_22 = arith.constant 0.000000e+00 : f32
    %48 = vector.broadcast %cst_22 : f32 to vector<2x16x128xf32>
    %49 = arith.maximumf %47, %48 : vector<2x16x128xf32>
    %c0_23 = arith.constant 0 : index
    %c0_24 = arith.constant 0 : index
    %c0_25 = arith.constant 0 : index
    %50 = vector.load %arg5[%c0_23, %c0_24, %c0_25] : memref<2x16x128xf32, #tpu.memory_space<vmem>>, vector<2x16x128xf32>
    tpu.vector_store %arg5[%c0_23, %c0_24, %c0_25], %49 {strides = array<i32>} : memref<2x16x128xf32, #tpu.memory_space<vmem>>, vector<2x16x128xf32>,
    return
  }
  func.func @transform_0(%arg0: i32) -> (i32, i32) {
    %c0_i32 = arith.constant 0 : i32
    %c0_i32_0 = arith.constant 0 : i32
    %c0_i32_1 = arith.constant 0 : i32
    return %c0_i32, %c0_i32_0 : i32, i32
  }
  func.func @transform_1(%arg0: i32) -> (i32, i32) {
    %c0_i32 = arith.constant 0 : i32
    %c0_i32_0 = arith.constant 0 : i32
    %c0_i32_1 = arith.constant 0 : i32
    return %c0_i32, %c0_i32_0 : i32, i32
  }
  func.func @transform_2(%arg0: i32) -> (i32, i32) {
    %c0_i32 = arith.constant 0 : i32
    %c0_i32_0 = arith.constant 0 : i32
    %c0_i32_1 = arith.constant 0 : i32
    return %c0_i32, %c0_i32_0 : i32, i32
  }
  func.func @transform_3(%arg0: i32) -> (i32, i32, i32) {
    %c0_i32 = arith.constant 0 : i32
    %c0_i32_0 = arith.constant 0 : i32
    %c0_i32_1 = arith.constant 0 : i32
    %c0_i32_2 = arith.constant 0 : i32
    return %c0_i32, %c0_i32_0, %c0_i32_1 : i32, i32, i32
  }
  func.func @transform_4(%arg0: i32) -> (i32, i32, i32) {
    %c0_i32 = arith.constant 0 : i32
    %c0_i32_0 = arith.constant 0 : i32
    %c0_i32_1 = arith.constant 0 : i32
    %c0_i32_2 = arith.constant 0 : i32
    return %c0_i32, %c0_i32_0, %c0_i32_1 : i32, i32, i32
  }
}

</mosaic_0001>

<llo_original>
// kernel: down_block_2d.1
$region0: #{down_block_2d.1}
  #allocation0 [shape = 'u32[]', space=smem, size = 0x4, offset = 0x4, fixed_abs, tag = 'smem constant byte address 0x4 - core index']
  #allocation1 [shape = 'u32[144,128]{1,0:T(1,128)}', space=vmem, size = 0x12000, scoped, tag = 'internal scratch']
  %s0 = inlined_call_operand.vmem [shape: bf16[128,128], index: 0, kind: input, shape index: {}]
  %s1 = inlined_call_operand.vmem [shape: bf16[128,128], index: 1, kind: input, shape index: {}]
  %s2 = inlined_call_operand.vmem [shape: bf16[288,128], index: 2, kind: input, shape index: {}]
  %s3 = inlined_call_operand.vmem [shape: bf16[9,128,128], index: 3, kind: input, shape index: {}]
  %s4 = inlined_call_operand.hbm [shape: f32[2,16,128], index: 4, kind: output, shape index: {}]
  %s5 = sld [smem:[#allocation0]]
  $region26: #{down_block_2d.1} parent=0
    _
  %s7 = ssub.s32 1, %s5
  %s8 = scalar_select 0, %s7, %s5
  $region1: #{down_block_2d.1} parent=0
    #allocation2 [shape = 'u8[16384]{0}', space=vmem, size = 0x4000, scoped, tag = 'output window, operand 0, single buffered']
    #allocation3 [shape = 's32[1]{0}', space=sflag, size = 0x4, scoped, tag = 'scoped memory for down_block_2d.1']
    %9 = vsyncpa [#allocation3], 0
    // Predicated region
    $region2: #{down_block_2d.1} parent=1 // pred_check
      _
    $region3: #{down_block_2d.1} parent=1 // pred_check_branch
      %11 = sbr.rel (0) target = $region5
    $region4: #{down_block_2d.1} parent=1 // pred_region
      _
    $region5: #{down_block_2d.1} parent=1 // pred_fallthru
      _
    // Predicated region
    $region6: #{down_block_2d.1} parent=1 // pred_check
      _
    $region7: #{down_block_2d.1} parent=1 // pred_check_branch
      %13 = sbr.rel (0) target = $region9
    $region8: #{down_block_2d.1} parent=1 // pred_region
      _
    $region9: #{down_block_2d.1} parent=1 // pred_fallthru
      _
    // Predicated region
    $region10: #{down_block_2d.1} parent=1 // pred_check
      _
    $region11: #{down_block_2d.1} parent=1 // pred_check_branch
      %15 = sbr.rel (0) target = $region13
    $region12: #{down_block_2d.1} parent=1 // pred_region
      _
    $region13: #{down_block_2d.1} parent=1 // pred_fallthru
      _
    // Predicated region
    $region14: #{down_block_2d.1} parent=1 // pred_check
      _
    $region15: #{down_block_2d.1} parent=1 // pred_check_branch
      %17 = sbr.rel (0) target = $region17
    $region16: #{down_block_2d.1} parent=1 // pred_region
      _
    $region17: #{down_block_2d.1} parent=1 // pred_fallthru
      _
    %v19 = vld [vmem:[%s0] sm:$0xf]
    %v20 = vld [vmem:[%s0 + $0x4] sm:$0xf]
    %v21 = vld [vmem:[%s0 + $0x8] sm:$0xf]
    %v22 = vld [vmem:[%s0 + $0xc] sm:$0xf]
    %v23 = vld [vmem:[%s0 + $0x10] sm:$0xf]
    %v24 = vld [vmem:[%s0 + $0x14] sm:$0xf]
    %v25 = vld [vmem:[%s0 + $0x18] sm:$0xf]
    %v26 = vld [vmem:[%s0 + $0x1c] sm:$0xf]
    %v27 = vld [vmem:[%s0 + $0x20] sm:$0xf]
    %v28 = vld [vmem:[%s0 + $0x24] sm:$0xf]
    %v29 = vld [vmem:[%s0 + $0x28] sm:$0xf]
    %v30 = vld [vmem:[%s0 + $0x2c] sm:$0xf]
    %v31 = vld [vmem:[%s0 + $0x30] sm:$0xf]
    %v32 = vld [vmem:[%s0 + $0x34] sm:$0xf]
    %v33 = vld [vmem:[%s0 + $0x38] sm:$0xf]
    %v34 = vld [vmem:[%s0 + $0x3c] sm:$0xf]
    %v35 = vld [vmem:[%s1] sm:$0xf]
    %v36 = vld [vmem:[%s1 + $0x4] sm:$0xf]
    %v37 = vld [vmem:[%s1 + $0x8] sm:$0xf]
    %v38 = vld [vmem:[%s1 + $0xc] sm:$0xf]
    %v39 = vld [vmem:[%s1 + $0x10] sm:$0xf]
    %v40 = vld [vmem:[%s1 + $0x14] sm:$0xf]
    %v41 = vld [vmem:[%s1 + $0x18] sm:$0xf]
    %v42 = vld [vmem:[%s1 + $0x1c] sm:$0xf]
    %v43 = vld [vmem:[%s1 + $0x20] sm:$0xf]
    %v44 = vld [vmem:[%s1 + $0x24] sm:$0xf]
    %v45 = vld [vmem:[%s1 + $0x28] sm:$0xf]
    %v46 = vld [vmem:[%s1 + $0x2c] sm:$0xf]
    %v47 = vld [vmem:[%s1 + $0x30] sm:$0xf]
    %v48 = vld [vmem:[%s1 + $0x34] sm:$0xf]
    %v49 = vld [vmem:[%s1 + $0x38] sm:$0xf]
    %v50 = vld [vmem:[%s1 + $0x3c] sm:$0xf]
    %v67 = vunpack.c.l.b16 %v19
    %v68 = vunpack.c.l.b16 %v20
    %v69 = vunpack.c.l.b16 %v21
    %v70 = vunpack.c.l.b16 %v22
    %v71 = vunpack.c.l.b16 %v23
    %v72 = vunpack.c.l.b16 %v24
    %v73 = vunpack.c.l.b16 %v25
    %v74 = vunpack.c.l.b16 %v26
    %v75 = vunpack.c.l.b16 %v27
    %v76 = vunpack.c.l.b16 %v28
    %v77 = vunpack.c.l.b16 %v29
    %v78 = vunpack.c.l.b16 %v30
    %v79 = vunpack.c.l.b16 %v31
    %v80 = vunpack.c.l.b16 %v32
    %v81 = vunpack.c.l.b16 %v33
    %v82 = vunpack.c.l.b16 %v34
    %v83 = vpack.c.b16 %v68, %v67
    %v84 = vpack.c.b16 %v70, %v69
    %v85 = vpack.c.b16 %v72, %v71
    %v86 = vpack.c.b16 %v74, %v73
    %v87 = vpack.c.b16 %v76, %v75
    %v88 = vpack.c.b16 %v78, %v77
    %v89 = vpack.c.b16 %v80, %v79
    %v90 = vpack.c.b16 %v82, %v81
    %v115 = vunpack.c.l.b16 %v35
    %v116 = vunpack.c.l.b16 %v36
    %v117 = vunpack.c.l.b16 %v37
    %v118 = vunpack.c.l.b16 %v38
    %v119 = vunpack.c.l.b16 %v39
    %v120 = vunpack.c.l.b16 %v40
    %v121 = vunpack.c.l.b16 %v41
    %v122 = vunpack.c.l.b16 %v42
    %v123 = vunpack.c.l.b16 %v43
    %v124 = vunpack.c.l.b16 %v44
    %v125 = vunpack.c.l.b16 %v45
    %v126 = vunpack.c.l.b16 %v46
    %v127 = vunpack.c.l.b16 %v47
    %v128 = vunpack.c.l.b16 %v48
    %v129 = vunpack.c.l.b16 %v49
    %v130 = vunpack.c.l.b16 %v50
    %v131 = vpack.c.b16 %v116, %v115
    %v132 = vpack.c.b16 %v118, %v117
    %v133 = vpack.c.b16 %v120, %v119
    %v134 = vpack.c.b16 %v122, %v121
    %v135 = vpack.c.b16 %v124, %v123
    %v136 = vpack.c.b16 %v126, %v125
    %v137 = vpack.c.b16 %v128, %v127
    %v138 = vpack.c.b16 %v130, %v129
    %147 = vmatprep.subr.bf16.mxu0 0
    %148 = vmatpush1.bf16.msra.mxu0 %v131
    %149 = vmatprep.subr.bf16.mxu0 0
    %150 = vmatpush1.bf16.msra.mxu0 %v132
    %151 = vmatprep.subr.bf16.mxu0 0
    %152 = vmatpush1.bf16.msra.mxu0 %v133
    %153 = vmatprep.subr.bf16.mxu0 0
    %154 = vmatpush1.bf16.msra.mxu0 %v134
    %155 = vmatprep.subr.bf16.mxu0 0
    %156 = vmatpush1.bf16.msra.mxu0 %v135
    %157 = vmatprep.subr.bf16.mxu0 0
    %158 = vmatpush1.bf16.msra.mxu0 %v136
    %159 = vmatprep.subr.bf16.mxu0 0
    %160 = vmatpush1.bf16.msra.mxu0 %v137
    %161 = vmatprep.subr.bf16.mxu0 0
    %162 = vmatpush1.bf16.msra.mxu0 %v138
    %163 = vmatprep.subr.bf16.mxu0 0
    %164 = vmatpush1.bf16.msra.mxu0 0
    %165 = vmatprep.subr.bf16.mxu0 0
    %166 = vmatpush1.bf16.msra.mxu0 0
    %167 = vmatprep.subr.bf16.mxu0 0
    %168 = vmatpush1.bf16.msra.mxu0 0
    %169 = vmatprep.subr.bf16.mxu0 0
    %170 = vmatpush1.bf16.msra.mxu0 0
    %171 = vmatprep.subr.bf16.mxu0 0
    %172 = vmatpush1.bf16.msra.mxu0 0
    %173 = vmatprep.subr.bf16.mxu0 0
    %174 = vmatpush1.bf16.msra.mxu0 0
    %175 = vmatprep.subr.bf16.mxu0 0
    %176 = vmatpush1.bf16.msra.mxu0 0
    %177 = vmatprep.subr.bf16.mxu0 0
    %178 = vmatpush1.bf16.msra.mxu0 0
    %179 = vmatprep.mubr.bf16.mxu0 0
    %180 = vmatmul.mubr.bf16.gmra.mrb[0].mxu0 %v83
    %v181 = vpop.f32.mrb[0].mxu0
    %v182 = vadd.f32 0.0, %v181
    %v183 = vpop.f32.mrb[0].mxu0
    %v184 = vpop.f32.mrb[0].mxu0
    %v185 = vadd.f32 0.0, %v184
    %v186 = vpop.f32.mrb[0].mxu0
    %187 = vmatprep.mubr.bf16.mxu0 0
    %188 = vmatmul.mubr.bf16.gmra.mrb[0].mxu0 %v84
    %v189 = vpop.f32.mrb[0].mxu0
    %v190 = vadd.f32 0.0, %v189
    %v191 = vpop.f32.mrb[0].mxu0
    %v192 = vpop.f32.mrb[0].mxu0
    %v193 = vadd.f32 0.0, %v192
    %v194 = vpop.f32.mrb[0].mxu0
    %195 = vmatprep.mubr.bf16.mxu0 0
    %196 = vmatmul.mubr.bf16.gmra.mrb[0].mxu0 %v85
    %v197 = vpop.f32.mrb[0].mxu0
    %v198 = vadd.f32 0.0, %v197
    %v199 = vpop.f32.mrb[0].mxu0
    %v200 = vpop.f32.mrb[0].mxu0
    %v201 = vadd.f32 0.0, %v200
    %v202 = vpop.f32.mrb[0].mxu0
    %203 = vmatprep.mubr.bf16.mxu0 0
    %204 = vmatmul.mubr.bf16.gmra.mrb[0].mxu0 %v86
    %v205 = vpop.f32.mrb[0].mxu0
    %v206 = vadd.f32 0.0, %v205
    %v207 = vpop.f32.mrb[0].mxu0
    %v208 = vpop.f32.mrb[0].mxu0
    %v209 = vadd.f32 0.0, %v208
    %v210 = vpop.f32.mrb[0].mxu0
    %211 = vmatprep.mubr.bf16.mxu0 0
    %212 = vmatmul.mubr.bf16.gmra.mrb[0].mxu0 %v87
    %v213 = vpop.f32.mrb[0].mxu0
    %v214 = vadd.f32 0.0, %v213
    %v215 = vpop.f32.mrb[0].mxu0
    %v216 = vpop.f32.mrb[0].mxu0
    %v217 = vadd.f32 0.0, %v216
    %v218 = vpop.f32.mrb[0].mxu0
    %219 = vmatprep.mubr.bf16.mxu0 0
    %220 = vmatmul.mubr.bf16.gmra.mrb[0].mxu0 %v88
    %v221 = vpop.f32.mrb[0].mxu0
    %v222 = vadd.f32 0.0, %v221
    %v223 = vpop.f32.mrb[0].mxu0
    %v224 = vpop.f32.mrb[0].mxu0
    %v225 = vadd.f32 0.0, %v224
    %v226 = vpop.f32.mrb[0].mxu0
    %227 = vmatprep.mubr.bf16.mxu0 0
    %228 = vmatmul.mubr.bf16.gmra.mrb[0].mxu0 %v89
    %v229 = vpop.f32.mrb[0].mxu0
    %v230 = vadd.f32 0.0, %v229
    %v231 = vpop.f32.mrb[0].mxu0
    %v232 = vpop.f32.mrb[0].mxu0
    %v233 = vadd.f32 0.0, %v232
    %v234 = vpop.f32.mrb[0].mxu0
    %235 = vmatprep.mubr.bf16.mxu0 0
    %236 = vmatmul.mubr.bf16.gmra.mrb[0].mxu0 %v90
    %v237 = vpop.f32.mrb[0].mxu0
    %v238 = vadd.f32 0.0, %v237
    %v239 = vpop.f32.mrb[0].mxu0
    %v240 = vpop.f32.mrb[0].mxu0
    %v241 = vadd.f32 0.0, %v240
    %v242 = vpop.f32.mrb[0].mxu0
    %243 = vdwg.mxu0
    %v244 = vadd.f32 %v182, %v185
    %v245 = vadd.f32 %v244, %v190
    %v246 = vadd.f32 %v245, %v193
    %v247 = vadd.f32 %v246, %v198
    %v248 = vadd.f32 %v247, %v201
    %v249 = vadd.f32 %v248, %v206
    %v250 = vadd.f32 %v249, %v209
    %v251 = vrot.slane %v250, 4
    %v252 = vadd.f32 %v250, %v251
    %v253 = vrot.slane %v252, 2
    %v254 = vadd.f32 %v252, %v253
    %v255 = vrot.slane %v254, 1
    %v256 = vadd.f32 %v254, %v255
    %v257 = vadd.f32 %v214, %v217
    %v258 = vadd.f32 %v257, %v222
    %v259 = vadd.f32 %v258, %v225
    %v260 = vadd.f32 %v259, %v230
    %v261 = vadd.f32 %v260, %v233
    %v262 = vadd.f32 %v261, %v238
    %v263 = vadd.f32 %v262, %v241
    %v264 = vrot.slane %v263, 4
    %v265 = vadd.f32 %v263, %v264
    %v266 = vrot.slane %v265, 2
    %v267 = vadd.f32 %v265, %v266
    %v268 = vrot.slane %v267, 1
    %v269 = vadd.f32 %v267, %v268
    %v270 = vrcp.pop 64.0
    %v271 = vmul.f32 %v256, %v270
    %v272 = vmul.f32 %v269, %v270
    %v273 = vsub.f32 %v182, %v271
    %v274 = vsub.f32 %v185, %v271
    %v275 = vsub.f32 %v190, %v271
    %v276 = vsub.f32 %v193, %v271
    %v277 = vsub.f32 %v198, %v271
    %v278 = vsub.f32 %v201, %v271
    %v279 = vsub.f32 %v206, %v271
    %v280 = vsub.f32 %v209, %v271
    %v281 = vsub.f32 %v214, %v272
    %v282 = vsub.f32 %v217, %v272
    %v283 = vsub.f32 %v222, %v272
    %v284 = vsub.f32 %v225, %v272
    %v285 = vsub.f32 %v230, %v272
    %v286 = vsub.f32 %v233, %v272
    %v287 = vsub.f32 %v238, %v272
    %v288 = vsub.f32 %v241, %v272
    %v289 = vmul.f32 %v273, %v273
    %v290 = vmul.f32 %v274, %v274
    %v291 = vmul.f32 %v275, %v275
    %v292 = vmul.f32 %v276, %v276
    %v293 = vmul.f32 %v277, %v277
    %v294 = vmul.f32 %v278, %v278
    %v295 = vmul.f32 %v279, %v279
    %v296 = vmul.f32 %v280, %v280
    %v297 = vmul.f32 %v281, %v281
    %v298 = vmul.f32 %v282, %v282
    %v299 = vmul.f32 %v283, %v283
    %v300 = vmul.f32 %v284, %v284
    %v301 = vmul.f32 %v285, %v285
    %v302 = vmul.f32 %v286, %v286
    %v303 = vmul.f32 %v287, %v287
    %v304 = vmul.f32 %v288, %v288
    %v305 = vadd.f32 %v289, %v290
    %v306 = vadd.f32 %v305, %v291
    %v307 = vadd.f32 %v306, %v292
    %v308 = vadd.f32 %v307, %v293
    %v309 = vadd.f32 %v308, %v294
    %v310 = vadd.f32 %v309, %v295
    %v311 = vadd.f32 %v310, %v296
    %v312 = vrot.slane %v311, 4
    %v313 = vadd.f32 %v311, %v312
    %v314 = vrot.slane %v313, 2
    %v315 = vadd.f32 %v313, %v314
    %v316 = vrot.slane %v315, 1
    %v317 = vadd.f32 %v315, %v316
    %v318 = vadd.f32 %v297, %v298
    %v319 = vadd.f32 %v318, %v299
    %v320 = vadd.f32 %v319, %v300
    %v321 = vadd.f32 %v320, %v301
    %v322 = vadd.f32 %v321, %v302
    %v323 = vadd.f32 %v322, %v303
    %v324 = vadd.f32 %v323, %v304
    %v325 = vrot.slane %v324, 4
    %v326 = vadd.f32 %v324, %v325
    %v327 = vrot.slane %v326, 2
    %v328 = vadd.f32 %v326, %v327
    %v329 = vrot.slane %v328, 1
    %v330 = vadd.f32 %v328, %v329
    %v331 = vmul.f32 %v317, %v270
    %v332 = vmul.f32 %v330, %v270
    %v333 = vadd.f32 %v331, 1e-05
    %v334 = vadd.f32 %v332, 1e-05
    %v335 = vrsqrt.pop %v333
    %v336 = vrsqrt.pop %v334
    %v337 = vmul.f32 %v273, %v335
    %v338 = vmul.f32 %v274, %v335
    %v339 = vmul.f32 %v275, %v335
    %v340 = vmul.f32 %v276, %v335
    %v341 = vmul.f32 %v277, %v335
    %v342 = vmul.f32 %v278, %v335
    %v343 = vmul.f32 %v279, %v335
    %v344 = vmul.f32 %v280, %v335
    %v345 = vmul.f32 %v281, %v336
    %v346 = vmul.f32 %v282, %v336
    %v347 = vmul.f32 %v283, %v336
    %v348 = vmul.f32 %v284, %v336
    %v349 = vmul.f32 %v285, %v336
    %v350 = vmul.f32 %v286, %v336
    %v351 = vmul.f32 %v287, %v336
    %v352 = vmul.f32 %v288, %v336
    %v353 = vmax.f32 %v337, 0.0
    %v354 = vmax.f32 %v338, 0.0
    %v355 = vmax.f32 %v339, 0.0
    %v356 = vmax.f32 %v340, 0.0
    %v357 = vmax.f32 %v341, 0.0
    %v358 = vmax.f32 %v342, 0.0
    %v359 = vmax.f32 %v343, 0.0
    %v360 = vmax.f32 %v344, 0.0
    %v361 = vmax.f32 %v345, 0.0
    %v362 = vmax.f32 %v346, 0.0
    %v363 = vmax.f32 %v347, 0.0
    %v364 = vmax.f32 %v348, 0.0
    %v365 = vmax.f32 %v349, 0.0
    %v366 = vmax.f32 %v350, 0.0
    %v367 = vmax.f32 %v351, 0.0
    %v368 = vmax.f32 %v352, 0.0
    %v369 = vpack.c.bf16 %v354, %v353
    %v370 = vpack.c.bf16 %v356, %v355
    %v371 = vpack.c.bf16 %v358, %v357
    %v372 = vpack.c.bf16 %v360, %v359
    %v373 = vpack.c.bf16 %v362, %v361
    %v374 = vpack.c.bf16 %v364, %v363
    %v375 = vpack.c.bf16 %v366, %v365
    %v376 = vpack.c.bf16 %v368, %v367
    %v377 = vld [vmem:[%s2] sm:$0xf]
    %v378 = vld [vmem:[%s2 + $0x4] sm:$0xf]
    %v379 = vld [vmem:[%s2 + $0x8] sm:$0xf]
    %v380 = vld [vmem:[%s2 + $0xc] sm:$0xf]
    %v381 = vld [vmem:[%s2 + $0x10] sm:$0xf]
    %v382 = vld [vmem:[%s2 + $0x14] sm:$0xf]
    %v383 = vld [vmem:[%s2 + $0x18] sm:$0xf]
    %v384 = vld [vmem:[%s2 + $0x1c] sm:$0xf]
    %v385 = vld [vmem:[%s2 + $0x20] sm:$0xf]
    %v386 = vld [vmem:[%s2 + $0x24] sm:$0xf]
    %v387 = vld [vmem:[%s2 + $0x28] sm:$0xf]
    %v388 = vld [vmem:[%s2 + $0x2c] sm:$0xf]
    %v389 = vld [vmem:[%s2 + $0x30] sm:$0xf]
    %v390 = vld [vmem:[%s2 + $0x34] sm:$0xf]
    %v391 = vld [vmem:[%s2 + $0x38] sm:$0xf]
    %v392 = vld [vmem:[%s2 + $0x3c] sm:$0xf]
    %v393 = vld [vmem:[%s2 + $0x40] sm:$0xf]
    %v394 = vld [vmem:[%s2 + $0x44] sm:$0xf]
    %v395 = vld [vmem:[%s2 + $0x48] sm:$0xf]
    %v396 = vld [vmem:[%s2 + $0x4c] sm:$0xf]
    %v397 = vld [vmem:[%s2 + $0x50] sm:$0xf]
    %v398 = vld [vmem:[%s2 + $0x54] sm:$0xf]
    %v399 = vld [vmem:[%s2 + $0x58] sm:$0xf]
    %v400 = vld [vmem:[%s2 + $0x5c] sm:$0xf]
    %v401 = vld [vmem:[%s2 + $0x60] sm:$0xf]
    %v402 = vld [vmem:[%s2 + $0x64] sm:$0xf]
    %v403 = vld [vmem:[%s2 + $0x68] sm:$0xf]
    %v404 = vld [vmem:[%s2 + $0x6c] sm:$0xf]
    %v405 = vld [vmem:[%s2 + $0x70] sm:$0xf]
    %v406 = vld [vmem:[%s2 + $0x74] sm:$0xf]
    %v407 = vld [vmem:[%s2 + $0x78] sm:$0xf]
    %v408 = vld [vmem:[%s2 + $0x7c] sm:$0xf]
    %v409 = vld [vmem:[%s2 + $0x80] sm:$0xf]
    %v410 = vld [vmem:[%s2 + $0x84] sm:$0xf]
    %v411 = vld [vmem:[%s2 + $0x88] sm:$0xf]
    %v412 = vld [vmem:[%s2 + $0x8c] sm:$0xf]
    %v449 = vunpack.c.l.b16 %v377
    %v450 = vunpack.c.l.b16 %v378
    %v451 = vunpack.c.l.b16 %v379
    %v452 = vunpack.c.l.b16 %v380
    %v453 = vunpack.c.l.b16 %v381
    %v454 = vunpack.c.l.b16 %v382
    %v455 = vunpack.c.l.b16 %v383
    %v456 = vunpack.c.l.b16 %v384
    %v457 = vunpack.c.l.b16 %v385
    %v458 = vunpack.c.l.b16 %v386
    %v459 = vunpack.c.l.b16 %v387
    %v460 = vunpack.c.l.b16 %v388
    %v461 = vunpack.c.l.b16 %v389
    %v462 = vunpack.c.l.b16 %v390
    %v463 = vunpack.c.l.b16 %v391
    %v464 = vunpack.c.l.b16 %v392
    %v465 = vunpack.c.l.b16 %v393
    %v466 = vunpack.c.l.b16 %v394
    %v467 = vunpack.c.l.b16 %v395
    %v468 = vunpack.c.l.b16 %v396
    %v469 = vunpack.c.l.b16 %v397
    %v470 = vunpack.c.l.b16 %v398
    %v471 = vunpack.c.l.b16 %v399
    %v472 = vunpack.c.l.b16 %v400
    %v473 = vunpack.c.l.b16 %v401
    %v474 = vunpack.c.l.b16 %v402
    %v475 = vunpack.c.l.b16 %v403
    %v476 = vunpack.c.l.b16 %v404
    %v477 = vunpack.c.l.b16 %v405
    %v478 = vunpack.c.l.b16 %v406
    %v479 = vunpack.c.l.b16 %v407
    %v480 = vunpack.c.l.b16 %v408
    %v481 = vunpack.c.l.b16 %v409
    %v482 = vunpack.c.l.b16 %v410
    %v483 = vunpack.c.l.b16 %v411
    %v484 = vunpack.c.l.b16 %v412
    %v485 = vpack.c.b16 %v450, %v449
    %v486 = vpack.c.b16 %v452, %v451
    %v487 = vpack.c.b16 %v454, %v453
    %v488 = vpack.c.b16 %v456, %v455
    %v489 = vpack.c.b16 %v458, %v457
    %v490 = vpack.c.b16 %v460, %v459
    %v491 = vpack.c.b16 %v462, %v461
    %v492 = vpack.c.b16 %v464, %v463
    %v493 = vpack.c.b16 %v466, %v465
    %v494 = vpack.c.b16 %v468, %v467
    %v495 = vpack.c.b16 %v470, %v469
    %v496 = vpack.c.b16 %v472, %v471
    %v497 = vpack.c.b16 %v474, %v473
    %v498 = vpack.c.b16 %v476, %v475
    %v499 = vpack.c.b16 %v478, %v477
    %v500 = vpack.c.b16 %v480, %v479
    %v501 = vpack.c.b16 %v482, %v481
    %v502 = vpack.c.b16 %v484, %v483
    %521 = vmatprep.subr.bf16.mxu0 0
    %522 = vmatpush1.bf16.msra.mxu0 %v369
    %523 = vmatprep.subr.bf16.mxu0 0
    %524 = vmatpush1.bf16.msra.mxu0 %v370
    %525 = vmatprep.subr.bf16.mxu0 0
    %526 = vmatpush1.bf16.msra.mxu0 %v371
    %527 = vmatprep.subr.bf16.mxu0 0
    %528 = vmatpush1.bf16.msra.mxu0 %v372
    %529 = vmatprep.subr.bf16.mxu0 0
    %530 = vmatpush1.bf16.msra.mxu0 %v373
    %531 = vmatprep.subr.bf16.mxu0 0
    %532 = vmatpush1.bf16.msra.mxu0 %v374
    %533 = vmatprep.subr.bf16.mxu0 0
    %534 = vmatpush1.bf16.msra.mxu0 %v375
    %535 = vmatprep.subr.bf16.mxu0 0
    %536 = vmatpush1.bf16.msra.mxu0 %v376
    %537 = vmatprep.subr.bf16.mxu0 0
    %538 = vmatpush1.bf16.msra.mxu0 0
    %539 = vmatprep.subr.bf16.mxu0 0
    %540 = vmatpush1.bf16.msra.mxu0 0
    %541 = vmatprep.subr.bf16.mxu0 0
    %542 = vmatpush1.bf16.msra.mxu0 0
    %543 = vmatprep.subr.bf16.mxu0 0
    %544 = vmatpush1.bf16.msra.mxu0 0
    %545 = vmatprep.subr.bf16.mxu0 0
    %546 = vmatpush1.bf16.msra.mxu0 0
    %547 = vmatprep.subr.bf16.mxu0 0
    %548 = vmatpush1.bf16.msra.mxu0 0
    %549 = vmatprep.subr.bf16.mxu0 0
    %550 = vmatpush1.bf16.msra.mxu0 0
    %551 = vmatprep.subr.bf16.mxu0 0
    %552 = vmatpush1.bf16.msra.mxu0 0
    %553 = vmatprep.mubr.bf16.mxu0 0
    %554 = vmatmul.mubr.bf16.gmra.mrb[0].mxu0 %v485
    %v555 = vpop.f32.mrb[0].mxu0
    %v556 = vadd.f32 0.0, %v555
    %v557 = vpop.f32.mrb[0].mxu0
    %v558 = vpop.f32.mrb[0].mxu0
    %v559 = vadd.f32 0.0, %v558
    %v560 = vpop.f32.mrb[0].mxu0
    %561 = vmatprep.mubr.bf16.mxu0 0
    %562 = vmatmul.mubr.bf16.gmra.mrb[0].mxu0 %v486
    %v563 = vpop.f32.mrb[0].mxu0
    %v564 = vadd.f32 0.0, %v563
    %v565 = vpop.f32.mrb[0].mxu0
    %v566 = vpop.f32.mrb[0].mxu0
    %v567 = vadd.f32 0.0, %v566
    %v568 = vpop.f32.mrb[0].mxu0
    %569 = vmatprep.mubr.bf16.mxu0 0
    %570 = vmatmul.mubr.bf16.gmra.mrb[0].mxu0 %v487
    %v571 = vpop.f32.mrb[0].mxu0
    %v572 = vadd.f32 0.0, %v571
    %v573 = vpop.f32.mrb[0].mxu0
    %v574 = vpop.f32.mrb[0].mxu0
    %v575 = vadd.f32 0.0, %v574
    %v576 = vpop.f32.mrb[0].mxu0
    %577 = vmatprep.mubr.bf16.mxu0 0
    %578 = vmatmul.mubr.bf16.gmra.mrb[0].mxu0 %v488
    %v579 = vpop.f32.mrb[0].mxu0
    %v580 = vadd.f32 0.0, %v579
    %v581 = vpop.f32.mrb[0].mxu0
    %v582 = vpop.f32.mrb[0].mxu0
    %v583 = vadd.f32 0.0, %v582
    %v584 = vpop.f32.mrb[0].mxu0
    %585 = vmatprep.mubr.bf16.mxu0 0
    %586 = vmatmul.mubr.bf16.gmra.mrb[0].mxu0 %v489
    %v587 = vpop.f32.mrb[0].mxu0
    %v588 = vadd.f32 0.0, %v587
    %v589 = vpop.f32.mrb[0].mxu0
    %v590 = vpop.f32.mrb[0].mxu0
    %v591 = vadd.f32 0.0, %v590
    %v592 = vpop.f32.mrb[0].mxu0
    %593 = vmatprep.mubr.bf16.mxu0 0
    %594 = vmatmul.mubr.bf16.gmra.mrb[0].mxu0 %v490
    %v595 = vpop.f32.mrb[0].mxu0
    %v596 = vadd.f32 0.0, %v595
    %v597 = vpop.f32.mrb[0].mxu0
    %v598 = vpop.f32.mrb[0].mxu0
    %v599 = vadd.f32 0.0, %v598
    %v600 = vpop.f32.mrb[0].mxu0
    %601 = vmatprep.mubr.bf16.mxu0 0
    %602 = vmatmul.mubr.bf16.gmra.mrb[0].mxu0 %v491
    %v603 = vpop.f32.mrb[0].mxu0
    %v604 = vadd.f32 0.0, %v603
    %v605 = vpop.f32.mrb[0].mxu0
    %v606 = vpop.f32.mrb[0].mxu0
    %v607 = vadd.f32 0.0, %v606
    %v608 = vpop.f32.mrb[0].mxu0
    %609 = vmatprep.mubr.bf16.mxu0 0
    %610 = vmatmul.mubr.bf16.gmra.mrb[0].mxu0 %v492
    %v611 = vpop.f32.mrb[0].mxu0
    %v612 = vadd.f32 0.0, %v611
    %v613 = vpop.f32.mrb[0].mxu0
    %v614 = vpop.f32.mrb[0].mxu0
    %v615 = vadd.f32 0.0, %v614
    %v616 = vpop.f32.mrb[0].mxu0
    %617 = vmatprep.mubr.bf16.mxu0 0
    %618 = vmatmul.mubr.bf16.gmra.mrb[0].mxu0 %v493
    %v619 = vpop.f32.mrb[0].mxu0
    %v620 = vadd.f32 0.0, %v619
    %v621 = vpop.f32.mrb[0].mxu0
    %v622 = vpop.f32.mrb[0].mxu0
    %v623 = vadd.f32 0.0, %v622
    %v624 = vpop.f32.mrb[0].mxu0
    %625 = vmatprep.mubr.bf16.mxu0 0
    %626 = vmatmul.mubr.bf16.gmra.mrb[0].mxu0 %v494
    %v627 = vpop.f32.mrb[0].mxu0
    %v628 = vadd.f32 0.0, %v627
    %v629 = vpop.f32.mrb[0].mxu0
    %v630 = vpop.f32.mrb[0].mxu0
    %v631 = vadd.f32 0.0, %v630
    %v632 = vpop.f32.mrb[0].mxu0
    %633 = vmatprep.mubr.bf16.mxu0 0
    %634 = vmatmul.mubr.bf16.gmra.mrb[0].mxu0 %v495
    %v635 = vpop.f32.mrb[0].mxu0
    %v636 = vadd.f32 0.0, %v635
    %v637 = vpop.f32.mrb[0].mxu0
    %v638 = vpop.f32.mrb[0].mxu0
    %v639 = vadd.f32 0.0, %v638
    %v640 = vpop.f32.mrb[0].mxu0
    %641 = vmatprep.mubr.bf16.mxu0 0
    %642 = vmatmul.mubr.bf16.gmra.mrb[0].mxu0 %v496
    %v643 = vpop.f32.mrb[0].mxu0
    %v644 = vadd.f32 0.0, %v643
    %v645 = vpop.f32.mrb[0].mxu0
    %v646 = vpop.f32.mrb[0].mxu0
    %v647 = vadd.f32 0.0, %v646
    %v648 = vpop.f32.mrb[0].mxu0
    %649 = vmatprep.mubr.bf16.mxu0 0
    %650 = vmatmul.mubr.bf16.gmra.mrb[0].mxu0 %v497
    %v651 = vpop.f32.mrb[0].mxu0
    %v652 = vadd.f32 0.0, %v651
    %v653 = vpop.f32.mrb[0].mxu0
    %v654 = vpop.f32.mrb[0].mxu0
    %v655 = vadd.f32 0.0, %v654
    %v656 = vpop.f32.mrb[0].mxu0
    %657 = vmatprep.mubr.bf16.mxu0 0
    %658 = vmatmul.mubr.bf16.gmra.mrb[0].mxu0 %v498
    %v659 = vpop.f32.mrb[0].mxu0
    %v660 = vadd.f32 0.0, %v659
    %v661 = vpop.f32.mrb[0].mxu0
    %v662 = vpop.f32.mrb[0].mxu0
    %v663 = vadd.f32 0.0, %v662
    %v664 = vpop.f32.mrb[0].mxu0
    %665 = vmatprep.mubr.bf16.mxu0 0
    %666 = vmatmul.mubr.bf16.gmra.mrb[0].mxu0 %v499
    %v667 = vpop.f32.mrb[0].mxu0
    %v668 = vadd.f32 0.0, %v667
    %v669 = vpop.f32.mrb[0].mxu0
    %v670 = vpop.f32.mrb[0].mxu0
    %v671 = vadd.f32 0.0, %v670
    %v672 = vpop.f32.mrb[0].mxu0
    %673 = vmatprep.mubr.bf16.mxu0 0
    %674 = vmatmul.mubr.bf16.gmra.mrb[0].mxu0 %v500
    %v675 = vpop.f32.mrb[0].mxu0
    %v676 = vadd.f32 0.0, %v675
    %v677 = vpop.f32.mrb[0].mxu0
    %v678 = vpop.f32.mrb[0].mxu0
    %v679 = vadd.f32 0.0, %v678
    %v680 = vpop.f32.mrb[0].mxu0
    %681 = vmatprep.mubr.bf16.mxu0 0
    %682 = vmatmul.mubr.bf16.gmra.mrb[0].mxu0 %v501
    %v683 = vpop.f32.mrb[0].mxu0
    %v684 = vadd.f32 0.0, %v683
    %v685 = vpop.f32.mrb[0].mxu0
    %v686 = vpop.f32.mrb[0].mxu0
    %v687 = vadd.f32 0.0, %v686
    %v688 = vpop.f32.mrb[0].mxu0
    %689 = vmatprep.mubr.bf16.mxu0 0
    %690 = vmatmul.mubr.bf16.gmra.mrb[0].mxu0 %v502
    %v691 = vpop.f32.mrb[0].mxu0
    %v692 = vadd.f32 0.0, %v691
    %v693 = vpop.f32.mrb[0].mxu0
    %v694 = vpop.f32.mrb[0].mxu0
    %v695 = vadd.f32 0.0, %v694
    %v696 = vpop.f32.mrb[0].mxu0
    %697 = vdwg.mxu0
    %v698 = vpack.c.bf16 %v559, %v556
    %v699 = vpack.c.bf16 %v567, %v564
    %v700 = vpack.c.bf16 %v575, %v572
    %v701 = vpack.c.bf16 %v583, %v580
    %v702 = vpack.c.bf16 %v591, %v588
    %v703 = vpack.c.bf16 %v599, %v596
    %v704 = vpack.c.bf16 %v607, %v604
    %v705 = vpack.c.bf16 %v615, %v612
    %v706 = vpack.c.bf16 %v623, %v620
    %v707 = vpack.c.bf16 %v631, %v628
    %v708 = vpack.c.bf16 %v639, %v636
    %v709 = vpack.c.bf16 %v647, %v644
    %v710 = vpack.c.bf16 %v655, %v652
    %v711 = vpack.c.bf16 %v663, %v660
    %v712 = vpack.c.bf16 %v671, %v668
    %v713 = vpack.c.bf16 %v679, %v676
    %v714 = vpack.c.bf16 %v687, %v684
    %v715 = vpack.c.bf16 %v695, %v692
    %v716 = vld [vmem:[%s3] sm:$0xf]
    %v717 = vld [vmem:[%s3 + $0x4] sm:$0xf]
    %v718 = vld [vmem:[%s3 + $0x8] sm:$0xf]
    %v719 = vld [vmem:[%s3 + $0xc] sm:$0xf]
    %v720 = vld [vmem:[%s3 + $0x10] sm:$0xf]
    %v721 = vld [vmem:[%s3 + $0x14] sm:$0xf]
    %v722 = vld [vmem:[%s3 + $0x18] sm:$0xf]
    %v723 = vld [vmem:[%s3 + $0x1c] sm:$0xf]
    %v724 = vld [vmem:[%s3 + $0x20] sm:$0xf]
    %v725 = vld [vmem:[%s3 + $0x24] sm:$0xf]
    %v726 = vld [vmem:[%s3 + $0x28] sm:$0xf]
    %v727 = vld [vmem:[%s3 + $0x2c] sm:$0xf]
    %v728 = vld [vmem:[%s3 + $0x30] sm:$0xf]
    %v729 = vld [vmem:[%s3 + $0x34] sm:$0xf]
    %v730 = vld [vmem:[%s3 + $0x38] sm:$0xf]
    %v731 = vld [vmem:[%s3 + $0x3c] sm:$0xf]
    %v732 = vld [vmem:[%s3 + $0x40] sm:$0xf]
    %v733 = vld [vmem:[%s3 + $0x44] sm:$0xf]
    %v734 = vld [vmem:[%s3 + $0x48] sm:$0xf]
    %v735 = vld [vmem:[%s3 + $0x4c] sm:$0xf]
    %v736 = vld [vmem:[%s3 + $0x50] sm:$0xf]
    %v737 = vld [vmem:[%s3 + $0x54] sm:$0xf]
    %v738 = vld [vmem:[%s3 + $0x58] sm:$0xf]
    %v739 = vld [vmem:[%s3 + $0x5c] sm:$0xf]
    %v740 = vld [vmem:[%s3 + $0x60] sm:$0xf]
    %v741 = vld [vmem:[%s3 + $0x64] sm:$0xf]
    %v742 = vld [vmem:[%s3 + $0x68] sm:$0xf]
    %v743 = vld [vmem:[%s3 + $0x6c] sm:$0xf]
    %v744 = vld [vmem:[%s3 + $0x70] sm:$0xf]
    %v745 = vld [vmem:[%s3 + $0x74] sm:$0xf]
    %v746 = vld [vmem:[%s3 + $0x78] sm:$0xf]
    %v747 = vld [vmem:[%s3 + $0x7c] sm:$0xf]
    %v748 = vld [vmem:[%s3 + $0x80] sm:$0xf]
    %v749 = vld [vmem:[%s3 + $0x84] sm:$0xf]
    %v750 = vld [vmem:[%s3 + $0x88] sm:$0xf]
    %v751 = vld [vmem:[%s3 + $0x8c] sm:$0xf]
    %v752 = vld [vmem:[%s3 + $0x90] sm:$0xf]
    %v753 = vld [vmem:[%s3 + $0x94] sm:$0xf]
    %v754 = vld [vmem:[%s3 + $0x98] sm:$0xf]
    %v755 = vld [vmem:[%s3 + $0x9c] sm:$0xf]
    %v756 = vld [vmem:[%s3 + $0xa0] sm:$0xf]
    %v757 = vld [vmem:[%s3 + $0xa4] sm:$0xf]
    %v758 = vld [vmem:[%s3 + $0xa8] sm:$0xf]
    %v759 = vld [vmem:[%s3 + $0xac] sm:$0xf]
    %v760 = vld [vmem:[%s3 + $0xb0] sm:$0xf]
    %v761 = vld [vmem:[%s3 + $0xb4] sm:$0xf]
    %v762 = vld [vmem:[%s3 + $0xb8] sm:$0xf]
    %v763 = vld [vmem:[%s3 + $0xbc] sm:$0xf]
    %v764 = vld [vmem:[%s3 + $0xc0] sm:$0xf]
    %v765 = vld [vmem:[%s3 + $0xc4] sm:$0xf]
    %v766 = vld [vmem:[%s3 + $0xc8] sm:$0xf]
    %v767 = vld [vmem:[%s3 + $0xcc] sm:$0xf]
    %v768 = vld [vmem:[%s3 + $0xd0] sm:$0xf]
    %v769 = vld [vmem:[%s3 + $0xd4] sm:$0xf]
    %v770 = vld [vmem:[%s3 + $0xd8] sm:$0xf]
    %v771 = vld [vmem:[%s3 + $0xdc] sm:$0xf]
    %v772 = vld [vmem:[%s3 + $0xe0] sm:$0xf]
    %v773 = vld [vmem:[%s3 + $0xe4] sm:$0xf]
    %v774 = vld [vmem:[%s3 + $0xe8] sm:$0xf]
    %v775 = vld [vmem:[%s3 + $0xec] sm:$0xf]
    %v776 = vld [vmem:[%s3 + $0xf0] sm:$0xf]
    %v777 = vld [vmem:[%s3 + $0xf4] sm:$0xf]
    %v778 = vld [vmem:[%s3 + $0xf8] sm:$0xf]
    %v779 = vld [vmem:[%s3 + $0xfc] sm:$0xf]
    %v780 = vld [vmem:[%s3 + $0x100] sm:$0xf]
    %v781 = vld [vmem:[%s3 + $0x104] sm:$0xf]
    %v782 = vld [vmem:[%s3 + $0x108] sm:$0xf]
    %v783 = vld [vmem:[%s3 + $0x10c] sm:$0xf]
    %v784 = vld [vmem:[%s3 + $0x110] sm:$0xf]
    %v785 = vld [vmem:[%s3 + $0x114] sm:$0xf]
    %v786 = vld [vmem:[%s3 + $0x118] sm:$0xf]
    %v787 = vld [vmem:[%s3 + $0x11c] sm:$0xf]
    %v788 = vld [vmem:[%s3 + $0x120] sm:$0xf]
    %v789 = vld [vmem:[%s3 + $0x124] sm:$0xf]
    %v790 = vld [vmem:[%s3 + $0x128] sm:$0xf]
    %v791 = vld [vmem:[%s3 + $0x12c] sm:$0xf]
    %v792 = vld [vmem:[%s3 + $0x130] sm:$0xf]
    %v793 = vld [vmem:[%s3 + $0x134] sm:$0xf]
    %v794 = vld [vmem:[%s3 + $0x138] sm:$0xf]
    %v795 = vld [vmem:[%s3 + $0x13c] sm:$0xf]
    %v796 = vld [vmem:[%s3 + $0x140] sm:$0xf]
    %v797 = vld [vmem:[%s3 + $0x144] sm:$0xf]
    %v798 = vld [vmem:[%s3 + $0x148] sm:$0xf]
    %v799 = vld [vmem:[%s3 + $0x14c] sm:$0xf]
    %v800 = vld [vmem:[%s3 + $0x150] sm:$0xf]
    %v801 = vld [vmem:[%s3 + $0x154] sm:$0xf]
    %v802 = vld [vmem:[%s3 + $0x158] sm:$0xf]
    %v803 = vld [vmem:[%s3 + $0x15c] sm:$0xf]
    %v804 = vld [vmem:[%s3 + $0x160] sm:$0xf]
    %v805 = vld [vmem:[%s3 + $0x164] sm:$0xf]
    %v806 = vld [vmem:[%s3 + $0x168] sm:$0xf]
    %v807 = vld [vmem:[%s3 + $0x16c] sm:$0xf]
    %v808 = vld [vmem:[%s3 + $0x170] sm:$0xf]
    %v809 = vld [vmem:[%s3 + $0x174] sm:$0xf]
    %v810 = vld [vmem:[%s3 + $0x178] sm:$0xf]
    %v811 = vld [vmem:[%s3 + $0x17c] sm:$0xf]
    %v812 = vld [vmem:[%s3 + $0x180] sm:$0xf]
    %v813 = vld [vmem:[%s3 + $0x184] sm:$0xf]
    %v814 = vld [vmem:[%s3 + $0x188] sm:$0xf]
    %v815 = vld [vmem:[%s3 + $0x18c] sm:$0xf]
    %v816 = vld [vmem:[%s3 + $0x190] sm:$0xf]
    %v817 = vld [vmem:[%s3 + $0x194] sm:$0xf]
    %v818 = vld [vmem:[%s3 + $0x198] sm:$0xf]
    %v819 = vld [vmem:[%s3 + $0x19c] sm:$0xf]
    %v820 = vld [vmem:[%s3 + $0x1a0] sm:$0xf]
    %v821 = vld [vmem:[%s3 + $0x1a4] sm:$0xf]
    %v822 = vld [vmem:[%s3 + $0x1a8] sm:$0xf]
    %v823 = vld [vmem:[%s3 + $0x1ac] sm:$0xf]
    %v824 = vld [vmem:[%s3 + $0x1b0] sm:$0xf]
    %v825 = vld [vmem:[%s3 + $0x1b4] sm:$0xf]
    %v826 = vld [vmem:[%s3 + $0x1b8] sm:$0xf]
    %v827 = vld [vmem:[%s3 + $0x1bc] sm:$0xf]
    %v828 = vld [vmem:[%s3 + $0x1c0] sm:$0xf]
    %v829 = vld [vmem:[%s3 + $0x1c4] sm:$0xf]
    %v830 = vld [vmem:[%s3 + $0x1c8] sm:$0xf]
    %v831 = vld [vmem:[%s3 + $0x1cc] sm:$0xf]
    %v832 = vld [vmem:[%s3 + $0x1d0] sm:$0xf]
    %v833 = vld [vmem:[%s3 + $0x1d4] sm:$0xf]
    %v834 = vld [vmem:[%s3 + $0x1d8] sm:$0xf]
    %v835 = vld [vmem:[%s3 + $0x1dc] sm:$0xf]
    %v836 = vld [vmem:[%s3 + $0x1e0] sm:$0xf]
    %v837 = vld [vmem:[%s3 + $0x1e4] sm:$0xf]
    %v838 = vld [vmem:[%s3 + $0x1e8] sm:$0xf]
    %v839 = vld [vmem:[%s3 + $0x1ec] sm:$0xf]
    %v840 = vld [vmem:[%s3 + $0x1f0] sm:$0xf]
    %v841 = vld [vmem:[%s3 + $0x1f4] sm:$0xf]
    %v842 = vld [vmem:[%s3 + $0x1f8] sm:$0xf]
    %v843 = vld [vmem:[%s3 + $0x1fc] sm:$0xf]
    %v844 = vld [vmem:[%s3 + $0x200] sm:$0xf]
    %v845 = vld [vmem:[%s3 + $0x204] sm:$0xf]
    %v846 = vld [vmem:[%s3 + $0x208] sm:$0xf]
    %v847 = vld [vmem:[%s3 + $0x20c] sm:$0xf]
    %v848 = vld [vmem:[%s3 + $0x210] sm:$0xf]
    %v849 = vld [vmem:[%s3 + $0x214] sm:$0xf]
    %v850 = vld [vmem:[%s3 + $0x218] sm:$0xf]
    %v851 = vld [vmem:[%s3 + $0x21c] sm:$0xf]
    %v852 = vld [vmem:[%s3 + $0x220] sm:$0xf]
    %v853 = vld [vmem:[%s3 + $0x224] sm:$0xf]
    %v854 = vld [vmem:[%s3 + $0x228] sm:$0xf]
    %v855 = vld [vmem:[%s3 + $0x22c] sm:$0xf]
    %v856 = vld [vmem:[%s3 + $0x230] sm:$0xf]
    %v857 = vld [vmem:[%s3 + $0x234] sm:$0xf]
    %v858 = vld [vmem:[%s3 + $0x238] sm:$0xf]
    %v859 = vld [vmem:[%s3 + $0x23c] sm:$0xf]
    %v876 = vunpack.c.l.b16 %v716
    %v877 = vunpack.c.l.b16 %v717
    %v878 = vunpack.c.l.b16 %v718
    %v879 = vunpack.c.l.b16 %v719
    %v880 = vunpack.c.l.b16 %v720
    %v881 = vunpack.c.l.b16 %v721
    %v882 = vunpack.c.l.b16 %v722
    %v883 = vunpack.c.l.b16 %v723
    %v884 = vunpack.c.l.b16 %v724
    %v885 = vunpack.c.l.b16 %v725
    %v886 = vunpack.c.l.b16 %v726
    %v887 = vunpack.c.l.b16 %v727
    %v888 = vunpack.c.l.b16 %v728
    %v889 = vunpack.c.l.b16 %v729
    %v890 = vunpack.c.l.b16 %v730
    %v891 = vunpack.c.l.b16 %v731
    %v892 = vpack.c.b16 %v877, %v876
    %v893 = vpack.c.b16 %v879, %v878
    %v894 = vpack.c.b16 %v881, %v880
    %v895 = vpack.c.b16 %v883, %v882
    %v896 = vpack.c.b16 %v885, %v884
    %v897 = vpack.c.b16 %v887, %v886
    %v898 = vpack.c.b16 %v889, %v888
    %v899 = vpack.c.b16 %v891, %v890
    %908 = vmatprep.subr.bf16.mxu0 0
    %909 = vmatpush1.bf16.msra.mxu0 %v892
    %910 = vmatprep.subr.bf16.mxu0 0
    %911 = vmatpush1.bf16.msra.mxu0 %v893
    %912 = vmatprep.subr.bf16.mxu0 0
    %913 = vmatpush1.bf16.msra.mxu0 %v894
    %914 = vmatprep.subr.bf16.mxu0 0
    %915 = vmatpush1.bf16.msra.mxu0 %v895
    %916 = vmatprep.subr.bf16.mxu0 0
    %917 = vmatpush1.bf16.msra.mxu0 %v896
    %918 = vmatprep.subr.bf16.mxu0 0
    %919 = vmatpush1.bf16.msra.mxu0 %v897
    %920 = vmatprep.subr.bf16.mxu0 0
    %921 = vmatpush1.bf16.msra.mxu0 %v898
    %922 = vmatprep.subr.bf16.mxu0 0
    %923 = vmatpush1.bf16.msra.mxu0 %v899
    %924 = vmatprep.subr.bf16.mxu0 0
    %925 = vmatpush1.bf16.msra.mxu0 0
    %926 = vmatprep.subr.bf16.mxu0 0
    %927 = vmatpush1.bf16.msra.mxu0 0
    %928 = vmatprep.subr.bf16.mxu0 0
    %929 = vmatpush1.bf16.msra.mxu0 0
    %930 = vmatprep.subr.bf16.mxu0 0
    %931 = vmatpush1.bf16.msra.mxu0 0
    %932 = vmatprep.subr.bf16.mxu0 0
    %933 = vmatpush1.bf16.msra.mxu0 0
    %934 = vmatprep.subr.bf16.mxu0 0
    %935 = vmatpush1.bf16.msra.mxu0 0
    %936 = vmatprep.subr.bf16.mxu0 0
    %937 = vmatpush1.bf16.msra.mxu0 0
    %938 = vmatprep.subr.bf16.mxu0 0
    %939 = vmatpush1.bf16.msra.mxu0 0
    %940 = vmatprep.mubr.bf16.mxu0 0
    %941 = vmatmul.mubr.bf16.gmra.mrb[0].mxu0 %v698
    %v942 = vpop.f32.mrb[0].mxu0
    %v943 = vadd.f32 0.0, %v942
    %v944 = vpop.f32.mrb[0].mxu0
    %v945 = vpop.f32.mrb[0].mxu0
    %v946 = vadd.f32 0.0, %v945
    %v947 = vpop.f32.mrb[0].mxu0
    %948 = vmatprep.mubr.bf16.mxu0 0
    %949 = vmatmul.mubr.bf16.gmra.mrb[0].mxu0 %v699
    %v950 = vpop.f32.mrb[0].mxu0
    %v951 = vadd.f32 0.0, %v950
    %v952 = vpop.f32.mrb[0].mxu0
    %v953 = vpop.f32.mrb[0].mxu0
    %v954 = vadd.f32 0.0, %v953
    %v955 = vpop.f32.mrb[0].mxu0
    %956 = vdwg.mxu0
    %v973 = vunpack.c.l.b16 %v732
    %v974 = vunpack.c.l.b16 %v733
    %v975 = vunpack.c.l.b16 %v734
    %v976 = vunpack.c.l.b16 %v735
    %v977 = vunpack.c.l.b16 %v736
    %v978 = vunpack.c.l.b16 %v737
    %v979 = vunpack.c.l.b16 %v738
    %v980 = vunpack.c.l.b16 %v739
    %v981 = vunpack.c.l.b16 %v740
    %v982 = vunpack.c.l.b16 %v741
    %v983 = vunpack.c.l.b16 %v742
    %v984 = vunpack.c.l.b16 %v743
    %v985 = vunpack.c.l.b16 %v744
    %v986 = vunpack.c.l.b16 %v745
    %v987 = vunpack.c.l.b16 %v746
    %v988 = vunpack.c.l.b16 %v747
    %v989 = vpack.c.b16 %v974, %v973
    %v990 = vpack.c.b16 %v976, %v975
    %v991 = vpack.c.b16 %v978, %v977
    %v992 = vpack.c.b16 %v980, %v979
    %v993 = vpack.c.b16 %v982, %v981
    %v994 = vpack.c.b16 %v984, %v983
    %v995 = vpack.c.b16 %v986, %v985
    %v996 = vpack.c.b16 %v988, %v987
    %1005 = vmatprep.subr.bf16.mxu0 0
    %1006 = vmatpush1.bf16.msra.mxu0 %v989
    %1007 = vmatprep.subr.bf16.mxu0 0
    %1008 = vmatpush1.bf16.msra.mxu0 %v990
    %1009 = vmatprep.subr.bf16.mxu0 0
    %1010 = vmatpush1.bf16.msra.mxu0 %v991
    %1011 = vmatprep.subr.bf16.mxu0 0
    %1012 = vmatpush1.bf16.msra.mxu0 %v992
    %1013 = vmatprep.subr.bf16.mxu0 0
    %1014 = vmatpush1.bf16.msra.mxu0 %v993
    %1015 = vmatprep.subr.bf16.mxu0 0
    %1016 = vmatpush1.bf16.msra.mxu0 %v994
    %1017 = vmatprep.subr.bf16.mxu0 0
    %1018 = vmatpush1.bf16.msra.mxu0 %v995
    %1019 = vmatprep.subr.bf16.mxu0 0
    %1020 = vmatpush1.bf16.msra.mxu0 %v996
    %1021 = vmatprep.subr.bf16.mxu0 0
    %1022 = vmatpush1.bf16.msra.mxu0 0
    %1023 = vmatprep.subr.bf16.mxu0 0
    %1024 = vmatpush1.bf16.msra.mxu0 0
    %1025 = vmatprep.subr.bf16.mxu0 0
    %1026 = vmatpush1.bf16.msra.mxu0 0
    %1027 = vmatprep.subr.bf16.mxu0 0
    %1028 = vmatpush1.bf16.msra.mxu0 0
    %1029 = vmatprep.subr.bf16.mxu0 0
    %1030 = vmatpush1.bf16.msra.mxu0 0
    %1031 = vmatprep.subr.bf16.mxu0 0
    %1032 = vmatpush1.bf16.msra.mxu0 0
    %1033 = vmatprep.subr.bf16.mxu0 0
    %1034 = vmatpush1.bf16.msra.mxu0 0
    %1035 = vmatprep.subr.bf16.mxu0 0
    %1036 = vmatpush1.bf16.msra.mxu0 0
    %1037 = vmatprep.mubr.bf16.mxu0 0
    %1038 = vmatmul.mubr.bf16.gmra.mrb[0].mxu0 %v700
    %v1039 = vpop.f32.mrb[0].mxu0
    %v1040 = vadd.f32 0.0, %v1039
    %v1041 = vpop.f32.mrb[0].mxu0
    %v1042 = vpop.f32.mrb[0].mxu0
    %v1043 = vadd.f32 0.0, %v1042
    %v1044 = vpop.f32.mrb[0].mxu0
    %1045 = vmatprep.mubr.bf16.mxu0 0
    %1046 = vmatmul.mubr.bf16.gmra.mrb[0].mxu0 %v701
    %v1047 = vpop.f32.mrb[0].mxu0
    %v1048 = vadd.f32 0.0, %v1047
    %v1049 = vpop.f32.mrb[0].mxu0
    %v1050 = vpop.f32.mrb[0].mxu0
    %v1051 = vadd.f32 0.0, %v1050
    %v1052 = vpop.f32.mrb[0].mxu0
    %1053 = vdwg.mxu0
    %v1070 = vunpack.c.l.b16 %v748
    %v1071 = vunpack.c.l.b16 %v749
    %v1072 = vunpack.c.l.b16 %v750
    %v1073 = vunpack.c.l.b16 %v751
    %v1074 = vunpack.c.l.b16 %v752
    %v1075 = vunpack.c.l.b16 %v753
    %v1076 = vunpack.c.l.b16 %v754
    %v1077 = vunpack.c.l.b16 %v755
    %v1078 = vunpack.c.l.b16 %v756
    %v1079 = vunpack.c.l.b16 %v757
    %v1080 = vunpack.c.l.b16 %v758
    %v1081 = vunpack.c.l.b16 %v759
    %v1082 = vunpack.c.l.b16 %v760
    %v1083 = vunpack.c.l.b16 %v761
    %v1084 = vunpack.c.l.b16 %v762
    %v1085 = vunpack.c.l.b16 %v763
    %v1086 = vpack.c.b16 %v1071, %v1070
    %v1087 = vpack.c.b16 %v1073, %v1072
    %v1088 = vpack.c.b16 %v1075, %v1074
    %v1089 = vpack.c.b16 %v1077, %v1076
    %v1090 = vpack.c.b16 %v1079, %v1078
    %v1091 = vpack.c.b16 %v1081, %v1080
    %v1092 = vpack.c.b16 %v1083, %v1082
    %v1093 = vpack.c.b16 %v1085, %v1084
    %1102 = vmatprep.subr.bf16.mxu0 0
    %1103 = vmatpush1.bf16.msra.mxu0 %v1086
    %1104 = vmatprep.subr.bf16.mxu0 0
    %1105 = vmatpush1.bf16.msra.mxu0 %v1087
    %1106 = vmatprep.subr.bf16.mxu0 0
    %1107 = vmatpush1.bf16.msra.mxu0 %v1088
    %1108 = vmatprep.subr.bf16.mxu0 0
    %1109 = vmatpush1.bf16.msra.mxu0 %v1089
    %1110 = vmatprep.subr.bf16.mxu0 0
    %1111 = vmatpush1.bf16.msra.mxu0 %v1090
    %1112 = vmatprep.subr.bf16.mxu0 0
    %1113 = vmatpush1.bf16.msra.mxu0 %v1091
    %1114 = vmatprep.subr.bf16.mxu0 0
    %1115 = vmatpush1.bf16.msra.mxu0 %v1092
    %1116 = vmatprep.subr.bf16.mxu0 0
    %1117 = vmatpush1.bf16.msra.mxu0 %v1093
    %1118 = vmatprep.subr.bf16.mxu0 0
    %1119 = vmatpush1.bf16.msra.mxu0 0
    %1120 = vmatprep.subr.bf16.mxu0 0
    %1121 = vmatpush1.bf16.msra.mxu0 0
    %1122 = vmatprep.subr.bf16.mxu0 0
    %1123 = vmatpush1.bf16.msra.mxu0 0
    %1124 = vmatprep.subr.bf16.mxu0 0
    %1125 = vmatpush1.bf16.msra.mxu0 0
    %1126 = vmatprep.subr.bf16.mxu0 0
    %1127 = vmatpush1.bf16.msra.mxu0 0
    %1128 = vmatprep.subr.bf16.mxu0 0
    %1129 = vmatpush1.bf16.msra.mxu0 0
    %1130 = vmatprep.subr.bf16.mxu0 0
    %1131 = vmatpush1.bf16.msra.mxu0 0
    %1132 = vmatprep.subr.bf16.mxu0 0
    %1133 = vmatpush1.bf16.msra.mxu0 0
    %1134 = vmatprep.mubr.bf16.mxu0 0
    %1135 = vmatmul.mubr.bf16.gmra.mrb[0].mxu0 %v702
    %v1136 = vpop.f32.mrb[0].mxu0
    %v1137 = vadd.f32 0.0, %v1136
    %v1138 = vpop.f32.mrb[0].mxu0
    %v1139 = vpop.f32.mrb[0].mxu0
    %v1140 = vadd.f32 0.0, %v1139
    %v1141 = vpop.f32.mrb[0].mxu0
    %1142 = vmatprep.mubr.bf16.mxu0 0
    %1143 = vmatmul.mubr.bf16.gmra.mrb[0].mxu0 %v703
    %v1144 = vpop.f32.mrb[0].mxu0
    %v1145 = vadd.f32 0.0, %v1144
    %v1146 = vpop.f32.mrb[0].mxu0
    %v1147 = vpop.f32.mrb[0].mxu0
    %v1148 = vadd.f32 0.0, %v1147
    %v1149 = vpop.f32.mrb[0].mxu0
    %1150 = vdwg.mxu0
    %v1167 = vunpack.c.l.b16 %v764
    %v1168 = vunpack.c.l.b16 %v765
    %v1169 = vunpack.c.l.b16 %v766
    %v1170 = vunpack.c.l.b16 %v767
    %v1171 = vunpack.c.l.b16 %v768
    %v1172 = vunpack.c.l.b16 %v769
    %v1173 = vunpack.c.l.b16 %v770
    %v1174 = vunpack.c.l.b16 %v771
    %v1175 = vunpack.c.l.b16 %v772
    %v1176 = vunpack.c.l.b16 %v773
    %v1177 = vunpack.c.l.b16 %v774
    %v1178 = vunpack.c.l.b16 %v775
    %v1179 = vunpack.c.l.b16 %v776
    %v1180 = vunpack.c.l.b16 %v777
    %v1181 = vunpack.c.l.b16 %v778
    %v1182 = vunpack.c.l.b16 %v779
    %v1183 = vpack.c.b16 %v1168, %v1167
    %v1184 = vpack.c.b16 %v1170, %v1169
    %v1185 = vpack.c.b16 %v1172, %v1171
    %v1186 = vpack.c.b16 %v1174, %v1173
    %v1187 = vpack.c.b16 %v1176, %v1175
    %v1188 = vpack.c.b16 %v1178, %v1177
    %v1189 = vpack.c.b16 %v1180, %v1179
    %v1190 = vpack.c.b16 %v1182, %v1181
    %1199 = vmatprep.subr.bf16.mxu0 0
    %1200 = vmatpush1.bf16.msra.mxu0 %v1183
    %1201 = vmatprep.subr.bf16.mxu0 0
    %1202 = vmatpush1.bf16.msra.mxu0 %v1184
    %1203 = vmatprep.subr.bf16.mxu0 0
    %1204 = vmatpush1.bf16.msra.mxu0 %v1185
    %1205 = vmatprep.subr.bf16.mxu0 0
    %1206 = vmatpush1.bf16.msra.mxu0 %v1186
    %1207 = vmatprep.subr.bf16.mxu0 0
    %1208 = vmatpush1.bf16.msra.mxu0 %v1187
    %1209 = vmatprep.subr.bf16.mxu0 0
    %1210 = vmatpush1.bf16.msra.mxu0 %v1188
    %1211 = vmatprep.subr.bf16.mxu0 0
    %1212 = vmatpush1.bf16.msra.mxu0 %v1189
    %1213 = vmatprep.subr.bf16.mxu0 0
    %1214 = vmatpush1.bf16.msra.mxu0 %v1190
    %1215 = vmatprep.subr.bf16.mxu0 0
    %1216 = vmatpush1.bf16.msra.mxu0 0
    %1217 = vmatprep.subr.bf16.mxu0 0
    %1218 = vmatpush1.bf16.msra.mxu0 0
    %1219 = vmatprep.subr.bf16.mxu0 0
    %1220 = vmatpush1.bf16.msra.mxu0 0
    %1221 = vmatprep.subr.bf16.mxu0 0
    %1222 = vmatpush1.bf16.msra.mxu0 0
    %1223 = vmatprep.subr.bf16.mxu0 0
    %1224 = vmatpush1.bf16.msra.mxu0 0
    %1225 = vmatprep.subr.bf16.mxu0 0
    %1226 = vmatpush1.bf16.msra.mxu0 0
    %1227 = vmatprep.subr.bf16.mxu0 0
    %1228 = vmatpush1.bf16.msra.mxu0 0
    %1229 = vmatprep.subr.bf16.mxu0 0
    %1230 = vmatpush1.bf16.msra.mxu0 0
    %1231 = vmatprep.mubr.bf16.mxu0 0
    %1232 = vmatmul.mubr.bf16.gmra.mrb[0].mxu0 %v704
    %v1233 = vpop.f32.mrb[0].mxu0
    %v1234 = vadd.f32 0.0, %v1233
    %v1235 = vpop.f32.mrb[0].mxu0
    %v1236 = vpop.f32.mrb[0].mxu0
    %v1237 = vadd.f32 0.0, %v1236
    %v1238 = vpop.f32.mrb[0].mxu0
    %1239 = vmatprep.mubr.bf16.mxu0 0
    %1240 = vmatmul.mubr.bf16.gmra.mrb[0].mxu0 %v705
    %v1241 = vpop.f32.mrb[0].mxu0
    %v1242 = vadd.f32 0.0, %v1241
    %v1243 = vpop.f32.mrb[0].mxu0
    %v1244 = vpop.f32.mrb[0].mxu0
    %v1245 = vadd.f32 0.0, %v1244
    %v1246 = vpop.f32.mrb[0].mxu0
    %1247 = vdwg.mxu0
    %v1264 = vunpack.c.l.b16 %v780
    %v1265 = vunpack.c.l.b16 %v781
    %v1266 = vunpack.c.l.b16 %v782
    %v1267 = vunpack.c.l.b16 %v783
    %v1268 = vunpack.c.l.b16 %v784
    %v1269 = vunpack.c.l.b16 %v785
    %v1270 = vunpack.c.l.b16 %v786
    %v1271 = vunpack.c.l.b16 %v787
    %v1272 = vunpack.c.l.b16 %v788
    %v1273 = vunpack.c.l.b16 %v789
    %v1274 = vunpack.c.l.b16 %v790
    %v1275 = vunpack.c.l.b16 %v791
    %v1276 = vunpack.c.l.b16 %v792
    %v1277 = vunpack.c.l.b16 %v793
    %v1278 = vunpack.c.l.b16 %v794
    %v1279 = vunpack.c.l.b16 %v795
    %v1280 = vpack.c.b16 %v1265, %v1264
    %v1281 = vpack.c.b16 %v1267, %v1266
    %v1282 = vpack.c.b16 %v1269, %v1268
    %v1283 = vpack.c.b16 %v1271, %v1270
    %v1284 = vpack.c.b16 %v1273, %v1272
    %v1285 = vpack.c.b16 %v1275, %v1274
    %v1286 = vpack.c.b16 %v1277, %v1276
    %v1287 = vpack.c.b16 %v1279, %v1278
    %1296 = vmatprep.subr.bf16.mxu0 0
    %1297 = vmatpush1.bf16.msra.mxu0 %v1280
    %1298 = vmatprep.subr.bf16.mxu0 0
    %1299 = vmatpush1.bf16.msra.mxu0 %v1281
    %1300 = vmatprep.subr.bf16.mxu0 0
    %1301 = vmatpush1.bf16.msra.mxu0 %v1282
    %1302 = vmatprep.subr.bf16.mxu0 0
    %1303 = vmatpush1.bf16.msra.mxu0 %v1283
    %1304 = vmatprep.subr.bf16.mxu0 0
    %1305 = vmatpush1.bf16.msra.mxu0 %v1284
    %1306 = vmatprep.subr.bf16.mxu0 0
    %1307 = vmatpush1.bf16.msra.mxu0 %v1285
    %1308 = vmatprep.subr.bf16.mxu0 0
    %1309 = vmatpush1.bf16.msra.mxu0 %v1286
    %1310 = vmatprep.subr.bf16.mxu0 0
    %1311 = vmatpush1.bf16.msra.mxu0 %v1287
    %1312 = vmatprep.subr.bf16.mxu0 0
    %1313 = vmatpush1.bf16.msra.mxu0 0
    %1314 = vmatprep.subr.bf16.mxu0 0
    %1315 = vmatpush1.bf16.msra.mxu0 0
    %1316 = vmatprep.subr.bf16.mxu0 0
    %1317 = vmatpush1.bf16.msra.mxu0 0
    %1318 = vmatprep.subr.bf16.mxu0 0
    %1319 = vmatpush1.bf16.msra.mxu0 0
    %1320 = vmatprep.subr.bf16.mxu0 0
    %1321 = vmatpush1.bf16.msra.mxu0 0
    %1322 = vmatprep.subr.bf16.mxu0 0
    %1323 = vmatpush1.bf16.msra.mxu0 0
    %1324 = vmatprep.subr.bf16.mxu0 0
    %1325 = vmatpush1.bf16.msra.mxu0 0
    %1326 = vmatprep.subr.bf16.mxu0 0
    %1327 = vmatpush1.bf16.msra.mxu0 0
    %1328 = vmatprep.mubr.bf16.mxu0 0
    %1329 = vmatmul.mubr.bf16.gmra.mrb[0].mxu0 %v706
    %v1330 = vpop.f32.mrb[0].mxu0
    %v1331 = vadd.f32 0.0, %v1330
    %v1332 = vpop.f32.mrb[0].mxu0
    %v1333 = vpop.f32.mrb[0].mxu0
    %v1334 = vadd.f32 0.0, %v1333
    %v1335 = vpop.f32.mrb[0].mxu0
    %1336 = vmatprep.mubr.bf16.mxu0 0
    %1337 = vmatmul.mubr.bf16.gmra.mrb[0].mxu0 %v707
    %v1338 = vpop.f32.mrb[0].mxu0
    %v1339 = vadd.f32 0.0, %v1338
    %v1340 = vpop.f32.mrb[0].mxu0
    %v1341 = vpop.f32.mrb[0].mxu0
    %v1342 = vadd.f32 0.0, %v1341
    %v1343 = vpop.f32.mrb[0].mxu0
    %1344 = vdwg.mxu0
    %v1361 = vunpack.c.l.b16 %v796
    %v1362 = vunpack.c.l.b16 %v797
    %v1363 = vunpack.c.l.b16 %v798
    %v1364 = vunpack.c.l.b16 %v799
    %v1365 = vunpack.c.l.b16 %v800
    %v1366 = vunpack.c.l.b16 %v801
    %v1367 = vunpack.c.l.b16 %v802
    %v1368 = vunpack.c.l.b16 %v803
    %v1369 = vunpack.c.l.b16 %v804
    %v1370 = vunpack.c.l.b16 %v805
    %v1371 = vunpack.c.l.b16 %v806
    %v1372 = vunpack.c.l.b16 %v807
    %v1373 = vunpack.c.l.b16 %v808
    %v1374 = vunpack.c.l.b16 %v809
    %v1375 = vunpack.c.l.b16 %v810
    %v1376 = vunpack.c.l.b16 %v811
    %v1377 = vpack.c.b16 %v1362, %v1361
    %v1378 = vpack.c.b16 %v1364, %v1363
    %v1379 = vpack.c.b16 %v1366, %v1365
    %v1380 = vpack.c.b16 %v1368, %v1367
    %v1381 = vpack.c.b16 %v1370, %v1369
    %v1382 = vpack.c.b16 %v1372, %v1371
    %v1383 = vpack.c.b16 %v1374, %v1373
    %v1384 = vpack.c.b16 %v1376, %v1375
    %1393 = vmatprep.subr.bf16.mxu0 0
    %1394 = vmatpush1.bf16.msra.mxu0 %v1377
    %1395 = vmatprep.subr.bf16.mxu0 0
    %1396 = vmatpush1.bf16.msra.mxu0 %v1378
    %1397 = vmatprep.subr.bf16.mxu0 0
    %1398 = vmatpush1.bf16.msra.mxu0 %v1379
    %1399 = vmatprep.subr.bf16.mxu0 0
    %1400 = vmatpush1.bf16.msra.mxu0 %v1380
    %1401 = vmatprep.subr.bf16.mxu0 0
    %1402 = vmatpush1.bf16.msra.mxu0 %v1381
    %1403 = vmatprep.subr.bf16.mxu0 0
    %1404 = vmatpush1.bf16.msra.mxu0 %v1382
    %1405 = vmatprep.subr.bf16.mxu0 0
    %1406 = vmatpush1.bf16.msra.mxu0 %v1383
    %1407 = vmatprep.subr.bf16.mxu0 0
    %1408 = vmatpush1.bf16.msra.mxu0 %v1384
    %1409 = vmatprep.subr.bf16.mxu0 0
    %1410 = vmatpush1.bf16.msra.mxu0 0
    %1411 = vmatprep.subr.bf16.mxu0 0
    %1412 = vmatpush1.bf16.msra.mxu0 0
    %1413 = vmatprep.subr.bf16.mxu0 0
    %1414 = vmatpush1.bf16.msra.mxu0 0
    %1415 = vmatprep.subr.bf16.mxu0 0
    %1416 = vmatpush1.bf16.msra.mxu0 0
    %1417 = vmatprep.subr.bf16.mxu0 0
    %1418 = vmatpush1.bf16.msra.mxu0 0
    %1419 = vmatprep.subr.bf16.mxu0 0
    %1420 = vmatpush1.bf16.msra.mxu0 0
    %1421 = vmatprep.subr.bf16.mxu0 0
    %1422 = vmatpush1.bf16.msra.mxu0 0
    %1423 = vmatprep.subr.bf16.mxu0 0
    %1424 = vmatpush1.bf16.msra.mxu0 0
    %1425 = vmatprep.mubr.bf16.mxu0 0
    %1426 = vmatmul.mubr.bf16.gmra.mrb[0].mxu0 %v708
    %v1427 = vpop.f32.mrb[0].mxu0
    %v1428 = vadd.f32 0.0, %v1427
    %v1429 = vpop.f32.mrb[0].mxu0
    %v1430 = vpop.f32.mrb[0].mxu0
    %v1431 = vadd.f32 0.0, %v1430
    %v1432 = vpop.f32.mrb[0].mxu0
    %1433 = vmatprep.mubr.bf16.mxu0 0
    %1434 = vmatmul.mubr.bf16.gmra.mrb[0].mxu0 %v709
    %v1435 = vpop.f32.mrb[0].mxu0
    %v1436 = vadd.f32 0.0, %v1435
    %v1437 = vpop.f32.mrb[0].mxu0
    %v1438 = vpop.f32.mrb[0].mxu0
    %v1439 = vadd.f32 0.0, %v1438
    %v1440 = vpop.f32.mrb[0].mxu0
    %1441 = vdwg.mxu0
    %v1458 = vunpack.c.l.b16 %v812
    %v1459 = vunpack.c.l.b16 %v813
    %v1460 = vunpack.c.l.b16 %v814
    %v1461 = vunpack.c.l.b16 %v815
    %v1462 = vunpack.c.l.b16 %v816
    %v1463 = vunpack.c.l.b16 %v817
    %v1464 = vunpack.c.l.b16 %v818
    %v1465 = vunpack.c.l.b16 %v819
    %v1466 = vunpack.c.l.b16 %v820
    %v1467 = vunpack.c.l.b16 %v821
    %v1468 = vunpack.c.l.b16 %v822
    %v1469 = vunpack.c.l.b16 %v823
    %v1470 = vunpack.c.l.b16 %v824
    %v1471 = vunpack.c.l.b16 %v825
    %v1472 = vunpack.c.l.b16 %v826
    %v1473 = vunpack.c.l.b16 %v827
    %v1474 = vpack.c.b16 %v1459, %v1458
    %v1475 = vpack.c.b16 %v1461, %v1460
    %v1476 = vpack.c.b16 %v1463, %v1462
    %v1477 = vpack.c.b16 %v1465, %v1464
    %v1478 = vpack.c.b16 %v1467, %v1466
    %v1479 = vpack.c.b16 %v1469, %v1468
    %v1480 = vpack.c.b16 %v1471, %v1470
    %v1481 = vpack.c.b16 %v1473, %v1472
    %1490 = vmatprep.subr.bf16.mxu0 0
    %1491 = vmatpush1.bf16.msra.mxu0 %v1474
    %1492 = vmatprep.subr.bf16.mxu0 0
    %1493 = vmatpush1.bf16.msra.mxu0 %v1475
    %1494 = vmatprep.subr.bf16.mxu0 0
    %1495 = vmatpush1.bf16.msra.mxu0 %v1476
    %1496 = vmatprep.subr.bf16.mxu0 0
    %1497 = vmatpush1.bf16.msra.mxu0 %v1477
    %1498 = vmatprep.subr.bf16.mxu0 0
    %1499 = vmatpush1.bf16.msra.mxu0 %v1478
    %1500 = vmatprep.subr.bf16.mxu0 0
    %1501 = vmatpush1.bf16.msra.mxu0 %v1479
    %1502 = vmatprep.subr.bf16.mxu0 0
    %1503 = vmatpush1.bf16.msra.mxu0 %v1480
    %1504 = vmatprep.subr.bf16.mxu0 0
    %1505 = vmatpush1.bf16.msra.mxu0 %v1481
    %1506 = vmatprep.subr.bf16.mxu0 0
    %1507 = vmatpush1.bf16.msra.mxu0 0
    %1508 = vmatprep.subr.bf16.mxu0 0
    %1509 = vmatpush1.bf16.msra.mxu0 0
    %1510 = vmatprep.subr.bf16.mxu0 0
    %1511 = vmatpush1.bf16.msra.mxu0 0
    %1512 = vmatprep.subr.bf16.mxu0 0
    %1513 = vmatpush1.bf16.msra.mxu0 0
    %1514 = vmatprep.subr.bf16.mxu0 0
    %1515 = vmatpush1.bf16.msra.mxu0 0
    %1516 = vmatprep.subr.bf16.mxu0 0
    %1517 = vmatpush1.bf16.msra.mxu0 0
    %1518 = vmatprep.subr.bf16.mxu0 0
    %1519 = vmatpush1.bf16.msra.mxu0 0
    %1520 = vmatprep.subr.bf16.mxu0 0
    %1521 = vmatpush1.bf16.msra.mxu0 0
    %1522 = vmatprep.mubr.bf16.mxu0 0
    %1523 = vmatmul.mubr.bf16.gmra.mrb[0].mxu0 %v710
    %v1524 = vpop.f32.mrb[0].mxu0
    %v1525 = vadd.f32 0.0, %v1524
    %v1526 = vpop.f32.mrb[0].mxu0
    %v1527 = vpop.f32.mrb[0].mxu0
    %v1528 = vadd.f32 0.0, %v1527
    %v1529 = vpop.f32.mrb[0].mxu0
    %1530 = vmatprep.mubr.bf16.mxu0 0
    %1531 = vmatmul.mubr.bf16.gmra.mrb[0].mxu0 %v711
    %v1532 = vpop.f32.mrb[0].mxu0
    %v1533 = vadd.f32 0.0, %v1532
    %v1534 = vpop.f32.mrb[0].mxu0
    %v1535 = vpop.f32.mrb[0].mxu0
    %v1536 = vadd.f32 0.0, %v1535
    %v1537 = vpop.f32.mrb[0].mxu0
    %1538 = vdwg.mxu0
    %v1555 = vunpack.c.l.b16 %v828
    %v1556 = vunpack.c.l.b16 %v829
    %v1557 = vunpack.c.l.b16 %v830
    %v1558 = vunpack.c.l.b16 %v831
    %v1559 = vunpack.c.l.b16 %v832
    %v1560 = vunpack.c.l.b16 %v833
    %v1561 = vunpack.c.l.b16 %v834
    %v1562 = vunpack.c.l.b16 %v835
    %v1563 = vunpack.c.l.b16 %v836
    %v1564 = vunpack.c.l.b16 %v837
    %v1565 = vunpack.c.l.b16 %v838
    %v1566 = vunpack.c.l.b16 %v839
    %v1567 = vunpack.c.l.b16 %v840
    %v1568 = vunpack.c.l.b16 %v841
    %v1569 = vunpack.c.l.b16 %v842
    %v1570 = vunpack.c.l.b16 %v843
    %v1571 = vpack.c.b16 %v1556, %v1555
    %v1572 = vpack.c.b16 %v1558, %v1557
    %v1573 = vpack.c.b16 %v1560, %v1559
    %v1574 = vpack.c.b16 %v1562, %v1561
    %v1575 = vpack.c.b16 %v1564, %v1563
    %v1576 = vpack.c.b16 %v1566, %v1565
    %v1577 = vpack.c.b16 %v1568, %v1567
    %v1578 = vpack.c.b16 %v1570, %v1569
    %1587 = vmatprep.subr.bf16.mxu0 0
    %1588 = vmatpush1.bf16.msra.mxu0 %v1571
    %1589 = vmatprep.subr.bf16.mxu0 0
    %1590 = vmatpush1.bf16.msra.mxu0 %v1572
    %1591 = vmatprep.subr.bf16.mxu0 0
    %1592 = vmatpush1.bf16.msra.mxu0 %v1573
    %1593 = vmatprep.subr.bf16.mxu0 0
    %1594 = vmatpush1.bf16.msra.mxu0 %v1574
    %1595 = vmatprep.subr.bf16.mxu0 0
    %1596 = vmatpush1.bf16.msra.mxu0 %v1575
    %1597 = vmatprep.subr.bf16.mxu0 0
    %1598 = vmatpush1.bf16.msra.mxu0 %v1576
    %1599 = vmatprep.subr.bf16.mxu0 0
    %1600 = vmatpush1.bf16.msra.mxu0 %v1577
    %1601 = vmatprep.subr.bf16.mxu0 0
    %1602 = vmatpush1.bf16.msra.mxu0 %v1578
    %1603 = vmatprep.subr.bf16.mxu0 0
    %1604 = vmatpush1.bf16.msra.mxu0 0
    %1605 = vmatprep.subr.bf16.mxu0 0
    %1606 = vmatpush1.bf16.msra.mxu0 0
    %1607 = vmatprep.subr.bf16.mxu0 0
    %1608 = vmatpush1.bf16.msra.mxu0 0
    %1609 = vmatprep.subr.bf16.mxu0 0
    %1610 = vmatpush1.bf16.msra.mxu0 0
    %1611 = vmatprep.subr.bf16.mxu0 0
    %1612 = vmatpush1.bf16.msra.mxu0 0
    %1613 = vmatprep.subr.bf16.mxu0 0
    %1614 = vmatpush1.bf16.msra.mxu0 0
    %1615 = vmatprep.subr.bf16.mxu0 0
    %1616 = vmatpush1.bf16.msra.mxu0 0
    %1617 = vmatprep.subr.bf16.mxu0 0
    %1618 = vmatpush1.bf16.msra.mxu0 0
    %1619 = vmatprep.mubr.bf16.mxu0 0
    %1620 = vmatmul.mubr.bf16.gmra.mrb[0].mxu0 %v712
    %v1621 = vpop.f32.mrb[0].mxu0
    %v1622 = vadd.f32 0.0, %v1621
    %v1623 = vpop.f32.mrb[0].mxu0
    %v1624 = vpop.f32.mrb[0].mxu0
    %v1625 = vadd.f32 0.0, %v1624
    %v1626 = vpop.f32.mrb[0].mxu0
    %1627 = vmatprep.mubr.bf16.mxu0 0
    %1628 = vmatmul.mubr.bf16.gmra.mrb[0].mxu0 %v713
    %v1629 = vpop.f32.mrb[0].mxu0
    %v1630 = vadd.f32 0.0, %v1629
    %v1631 = vpop.f32.mrb[0].mxu0
    %v1632 = vpop.f32.mrb[0].mxu0
    %v1633 = vadd.f32 0.0, %v1632
    %v1634 = vpop.f32.mrb[0].mxu0
    %1635 = vdwg.mxu0
    %v1652 = vunpack.c.l.b16 %v844
    %v1653 = vunpack.c.l.b16 %v845
    %v1654 = vunpack.c.l.b16 %v846
    %v1655 = vunpack.c.l.b16 %v847
    %v1656 = vunpack.c.l.b16 %v848
    %v1657 = vunpack.c.l.b16 %v849
    %v1658 = vunpack.c.l.b16 %v850
    %v1659 = vunpack.c.l.b16 %v851
    %v1660 = vunpack.c.l.b16 %v852
    %v1661 = vunpack.c.l.b16 %v853
    %v1662 = vunpack.c.l.b16 %v854
    %v1663 = vunpack.c.l.b16 %v855
    %v1664 = vunpack.c.l.b16 %v856
    %v1665 = vunpack.c.l.b16 %v857
    %v1666 = vunpack.c.l.b16 %v858
    %v1667 = vunpack.c.l.b16 %v859
    %v1668 = vpack.c.b16 %v1653, %v1652
    %v1669 = vpack.c.b16 %v1655, %v1654
    %v1670 = vpack.c.b16 %v1657, %v1656
    %v1671 = vpack.c.b16 %v1659, %v1658
    %v1672 = vpack.c.b16 %v1661, %v1660
    %v1673 = vpack.c.b16 %v1663, %v1662
    %v1674 = vpack.c.b16 %v1665, %v1664
    %v1675 = vpack.c.b16 %v1667, %v1666
    %1684 = vmatprep.subr.bf16.mxu0 0
    %1685 = vmatpush1.bf16.msra.mxu0 %v1668
    %1686 = vmatprep.subr.bf16.mxu0 0
    %1687 = vmatpush1.bf16.msra.mxu0 %v1669
    %1688 = vmatprep.subr.bf16.mxu0 0
    %1689 = vmatpush1.bf16.msra.mxu0 %v1670
    %1690 = vmatprep.subr.bf16.mxu0 0
    %1691 = vmatpush1.bf16.msra.mxu0 %v1671
    %1692 = vmatprep.subr.bf16.mxu0 0
    %1693 = vmatpush1.bf16.msra.mxu0 %v1672
    %1694 = vmatprep.subr.bf16.mxu0 0
    %1695 = vmatpush1.bf16.msra.mxu0 %v1673
    %1696 = vmatprep.subr.bf16.mxu0 0
    %1697 = vmatpush1.bf16.msra.mxu0 %v1674
    %1698 = vmatprep.subr.bf16.mxu0 0
    %1699 = vmatpush1.bf16.msra.mxu0 %v1675
    %1700 = vmatprep.subr.bf16.mxu0 0
    %1701 = vmatpush1.bf16.msra.mxu0 0
    %1702 = vmatprep.subr.bf16.mxu0 0
    %1703 = vmatpush1.bf16.msra.mxu0 0
    %1704 = vmatprep.subr.bf16.mxu0 0
    %1705 = vmatpush1.bf16.msra.mxu0 0
    %1706 = vmatprep.subr.bf16.mxu0 0
    %1707 = vmatpush1.bf16.msra.mxu0 0
    %1708 = vmatprep.subr.bf16.mxu0 0
    %1709 = vmatpush1.bf16.msra.mxu0 0
    %1710 = vmatprep.subr.bf16.mxu0 0
    %1711 = vmatpush1.bf16.msra.mxu0 0
    %1712 = vmatprep.subr.bf16.mxu0 0
    %1713 = vmatpush1.bf16.msra.mxu0 0
    %1714 = vmatprep.subr.bf16.mxu0 0
    %1715 = vmatpush1.bf16.msra.mxu0 0
    %1716 = vmatprep.mubr.bf16.mxu0 0
    %1717 = vmatmul.mubr.bf16.gmra.mrb[0].mxu0 %v714
    %v1718 = vpop.f32.mrb[0].mxu0
    %v1719 = vadd.f32 0.0, %v1718
    %v1720 = vpop.f32.mrb[0].mxu0
    %v1721 = vpop.f32.mrb[0].mxu0
    %v1722 = vadd.f32 0.0, %v1721
    %v1723 = vpop.f32.mrb[0].mxu0
    %1724 = vmatprep.mubr.bf16.mxu0 0
    %1725 = vmatmul.mubr.bf16.gmra.mrb[0].mxu0 %v715
    %v1726 = vpop.f32.mrb[0].mxu0
    %v1727 = vadd.f32 0.0, %v1726
    %v1728 = vpop.f32.mrb[0].mxu0
    %v1729 = vpop.f32.mrb[0].mxu0
    %v1730 = vadd.f32 0.0, %v1729
    %v1731 = vpop.f32.mrb[0].mxu0
    %1732 = vdwg.mxu0
    %v1733 = vadd.f32 %v943, %v1040
    %v1734 = vadd.f32 %v1733, %v1137
    %v1735 = vadd.f32 %v1734, %v1234
    %v1736 = vadd.f32 %v1735, %v1331
    %v1737 = vadd.f32 %v1736, %v1428
    %v1738 = vadd.f32 %v1737, %v1525
    %v1739 = vadd.f32 %v1738, %v1622
    %v1740 = vadd.f32 %v1739, %v1719
    %v1741 = vadd.f32 %v946, %v1043
    %v1742 = vadd.f32 %v1741, %v1140
    %v1743 = vadd.f32 %v1742, %v1237
    %v1744 = vadd.f32 %v1743, %v1334
    %v1745 = vadd.f32 %v1744, %v1431
    %v1746 = vadd.f32 %v1745, %v1528
    %v1747 = vadd.f32 %v1746, %v1625
    %v1748 = vadd.f32 %v1747, %v1722
    %v1749 = vadd.f32 %v951, %v1048
    %v1750 = vadd.f32 %v1749, %v1145
    %v1751 = vadd.f32 %v1750, %v1242
    %v1752 = vadd.f32 %v1751, %v1339
    %v1753 = vadd.f32 %v1752, %v1436
    %v1754 = vadd.f32 %v1753, %v1533
    %v1755 = vadd.f32 %v1754, %v1630
    %v1756 = vadd.f32 %v1755, %v1727
    %v1757 = vadd.f32 %v954, %v1051
    %v1758 = vadd.f32 %v1757, %v1148
    %v1759 = vadd.f32 %v1758, %v1245
    %v1760 = vadd.f32 %v1759, %v1342
    %v1761 = vadd.f32 %v1760, %v1439
    %v1762 = vadd.f32 %v1761, %v1536
    %v1763 = vadd.f32 %v1762, %v1633
    %v1764 = vadd.f32 %v1763, %v1730
    %v1765 = vadd.f32 %v1740, %v1748
    %v1766 = vrot.slane %v1765, 4
    %v1767 = vadd.f32 %v1765, %v1766
    %v1768 = vrot.slane %v1767, 2
    %v1769 = vadd.f32 %v1767, %v1768
    %v1770 = vrot.slane %v1769, 1
    %v1771 = vadd.f32 %v1769, %v1770
    %v1772 = vadd.f32 %v1756, %v1764
    %v1773 = vrot.slane %v1772, 4
    %v1774 = vadd.f32 %v1772, %v1773
    %v1775 = vrot.slane %v1774, 2
    %v1776 = vadd.f32 %v1774, %v1775
    %v1777 = vrot.slane %v1776, 1
    %v1778 = vadd.f32 %v1776, %v1777
    %v1779 = vrcp.pop 16.0
    %v1780 = vmul.f32 %v1771, %v1779
    %v1781 = vmul.f32 %v1778, %v1779
    %v1782 = vsub.f32 %v1740, %v1780
    %v1783 = vsub.f32 %v1748, %v1780
    %v1784 = vsub.f32 %v1756, %v1781
    %v1785 = vsub.f32 %v1764, %v1781
    %v1786 = vmul.f32 %v1782, %v1782
    %v1787 = vmul.f32 %v1783, %v1783
    %v1788 = vmul.f32 %v1784, %v1784
    %v1789 = vmul.f32 %v1785, %v1785
    %v1790 = vadd.f32 %v1786, %v1787
    %v1791 = vrot.slane %v1790, 4
    %v1792 = vadd.f32 %v1790, %v1791
    %v1793 = vrot.slane %v1792, 2
    %v1794 = vadd.f32 %v1792, %v1793
    %v1795 = vrot.slane %v1794, 1
    %v1796 = vadd.f32 %v1794, %v1795
    %v1797 = vadd.f32 %v1788, %v1789
    %v1798 = vrot.slane %v1797, 4
    %v1799 = vadd.f32 %v1797, %v1798
    %v1800 = vrot.slane %v1799, 2
    %v1801 = vadd.f32 %v1799, %v1800
    %v1802 = vrot.slane %v1801, 1
    %v1803 = vadd.f32 %v1801, %v1802
    %v1804 = vmul.f32 %v1796, %v1779
    %v1805 = vmul.f32 %v1803, %v1779
    %v1806 = vadd.f32 %v1804, 1e-05
    %v1807 = vadd.f32 %v1805, 1e-05
    %v1808 = vrsqrt.pop %v1806
    %v1809 = vrsqrt.pop %v1807
    %v1810 = vmul.f32 %v1782, %v1808
    %v1811 = vmul.f32 %v1783, %v1808
    %v1812 = vmul.f32 %v1784, %v1809
    %v1813 = vmul.f32 %v1785, %v1809
    %v1814 = vmax.f32 %v1810, 0.0
    %v1815 = vmax.f32 %v1811, 0.0
    %v1816 = vmax.f32 %v1812, 0.0
    %v1817 = vmax.f32 %v1813, 0.0
    %1818 = vst [vmem:[#allocation2] sm:$0xff] %v1814
    %1819 = vst [vmem:[#allocation2 + $0x8] sm:$0xff] %v1815
    %1820 = vst [vmem:[#allocation2 + $0x10] sm:$0xff] %v1816
    %1821 = vst [vmem:[#allocation2 + $0x18] sm:$0xff] %v1817
    // Predicated region
    $region18: #{down_block_2d.1} parent=1 // pred_check
      _
    $region19: #{down_block_2d.1} parent=1 // pred_check_branch
      %1823 = sbr.rel (0) target = $region21
    $region20: #{down_block_2d.1} parent=1 // pred_region
      %s1825 = ssub.s32 512, 512
      %1826 = vsyncadd [#allocation3], %s1825
      %s1827 = sshll.u32 [#allocation2], 4
      %s1828 = int_to_ptr.vmem [resolvable:$true] %s1827
      %1833 = dma.vmem_to_hbm [thread:$0]  %s1828, 512, %s4, [#allocation3], 128, 128, 8
    $region21: #{down_block_2d.1} parent=1 // pred_fallthru
      _
    // Predicated region
    $region22: #{down_block_2d.1} parent=1 // pred_check
      _
    $region23: #{down_block_2d.1} parent=1 // pred_check_branch
      %1835 = sbr.rel (0) target = $region25
    $region24: #{down_block_2d.1} parent=1 // pred_region
      %1836 = dma.done [#allocation3], 512
    $region25: #{down_block_2d.1} parent=1 // pred_fallthru
      _
    %1837 = vsyncpa [#allocation3], 1

</llo_original>
